<compile_context>
chip_gen: v6e
topology: v6e:2x2x1
jax: 0.10.0
libtpu: 0.0.40
codegen_flags: <defaults>
</compile_context>

<pallas_src>
import jax
import jax.numpy as jnp
from jax.experimental import pallas as pl
from jax.experimental.pallas import tpu as pltpu


def _encoder_kernel(x2_ref, adj2_ref, gneigh_ref, wproj_ref, wcol_ref, w2_ref,
                    bb_ref, hiden_ref, h_ref, scores_ref):
    f32 = jnp.float32
    N = adj2_ref.shape[1]            # adj2 is [2N, N]
    Fo = w2_ref.shape[0]             # weight2 is [Fo, Fi]

    x2 = x2_ref[...]                 # [2N, Fi]   ([feat ; feat_a])
    adj2 = adj2_ref[...]             # [2N, N]    ([adj ; adj])

    # ---- projection + both attention scores in ONE MXU pass ----------------
    # wproj = [weight1@W | weight1@W@a_src | weight1@W@a_dst]  (folded on host)
    big = jnp.dot(x2, wproj_ref[...], preferred_element_type=f32)   # [2N, Fo+2]
    wh2 = big[:, :Fo]                                               # Wh, both branches
    src = big[:, Fo:Fo + 1]                                         # [2N, 1]
    dst_row = big[:, Fo + 1:Fo + 2].T                               # [1, 2N]

    # ---- fused GAT softmax over both branches ([2N, N]) ---------------------
    row_is_first = jax.lax.broadcasted_iota(jnp.int32, (2 * N, 1), 0) < N
    dst_b = jnp.where(row_is_first, dst_row[:, :N], dst_row[:, N:])  # per-branch dst row
    e = src + dst_b                                                  # [2N, N]
    e = jnp.maximum(e, f32(0.2) * e)                                 # LeakyReLU(0.2)
    e = jnp.where(adj2 > 0, e, f32(-9e15))                           # adjacency mask
    m = jnp.max(e, axis=1, keepdims=True)
    p = jnp.exp(e - m)                                               # softmax numerator
    # row-sum of p via the MXU (one tiny matmul) instead of an XLU lane reduce
    denom = jnp.dot(p, jnp.ones((N, 1), f32), preferred_element_type=f32)   # [2N, 1]

    # attention output per branch (different Wh), restacked to [2N, Fo];
    # normalization divides the small [2N,Fo] numerator, not the [2N,N] p.
    numA = jnp.dot(p[:N], wh2[:N], preferred_element_type=f32)
    numB = jnp.dot(p[N:], wh2[N:], preferred_element_type=f32)
    za = jnp.concatenate([numA, numB], axis=0) * pl.reciprocal(denom, approx=True)

    # ---- ResidualLayer (shared weights), both branches fused ----------------
    rw1 = wcol_ref[0:Fo, :]
    rw2 = wcol_ref[Fo:2 * Fo, :]
    wbt = wcol_ref[2 * Fo:3 * Fo, :]
    rb1 = wcol_ref[3 * Fo:3 * Fo + 1, :]
    rb2 = wcol_ref[3 * Fo + 8:3 * Fo + 9, :]
    r = jnp.maximum(jnp.dot(za, rw1, preferred_element_type=f32) + rb1, 0.0)
    r = jnp.dot(r, rw2, preferred_element_type=f32) + rb2
    zr = jnp.maximum(r + za, 0.0)                       # [2N, Fo] = [emb ; emb_a]

    z1 = zr[:N]                                         # hiden_emb
    hiden_ref[...] = z1

    # ---- h = adj @ (hiden_emb @ weight2)  (torch.spmm as dense matmul) ------
    h_ref[...] = jnp.dot(adj2[:N],
                         jnp.dot(z1, w2_ref[...], preferred_element_type=f32),
                         preferred_element_type=f32)

    # ---- AvgReadout + sigmoid; row_sum rides as a free MXU lane --------------
    # emb = relu(z) == z since z >= 0 after the residual's final ReLU.
    embcat = jnp.concatenate([z1, zr[N:], jnp.ones((N, 1), f32)], axis=1)   # [N, 2Fo+1]
    vs = jnp.dot(gneigh_ref[...], embcat, preferred_element_type=f32)       # [N, 2Fo+1]
    inv_rs = pl.reciprocal(jnp.maximum(vs[:, 2 * Fo:], 1e-12), approx=True)  # [N, 1]

    def readout(v):
        ge = v * inv_rs
        ssq = jnp.sum(ge * ge, axis=1, keepdims=True)
        ge = ge * jax.lax.rsqrt(jnp.maximum(ssq, f32(1e-24)))   # F.normalize(p=2)
        return jax.nn.sigmoid(ge)

    g = readout(vs[:, :Fo])
    g_a = readout(vs[:, Fo:2 * Fo])

    # ---- Discriminator: nn.Bilinear(n_h, n_h, 1) ----------------------------
    t2 = jnp.dot(jnp.concatenate([g, g_a], axis=0), wbt,
                 preferred_element_type=f32)                    # [2N, Fo] = [t ; t_a]
    t2_sw = pltpu.roll(t2, shift=N, axis=0)                     # [t_a ; t]  (XLU slot)
    colA = jnp.sum(zr * t2, axis=1, keepdims=True)              # [emb.t ; emb_a.t_a]
    colB = jnp.sum(zr * t2_sw, axis=1, keepdims=True)           # [emb.t_a ; emb_a.t]
    bb = bb_ref[0, 0]                                           # SMEM scalar

    # logits [ret | ret_a], assembled once, single store.
    scores_ref[...] = jnp.concatenate(
        [colA[:N], colB[N:], colA[N:], colB[:N]], axis=1) + bb   # [N, 4]


def encoder_forward(feat, feat_a, adj, graph_neigh, params):
    """Returns (hiden_emb, h, ret, ret_a) like the PyTorch module."""
    N, Fi = feat.shape
    Fo = params["weight1"].shape[1]

    # ---- host-side algebraic folding / operand packing (tiny, one-time) ----
    w1W = params["weight1"] @ params["att_W"]                       # fold weight1 @ W
    wproj = jnp.concatenate(
        [w1W, w1W @ params["att_a_src"], w1W @ params["att_a_dst"]], axis=1)  # [Fi, Fo+2]
    pad = jnp.zeros((7, Fo), jnp.float32)                           # keep 8-aligned slices
    wcol = jnp.concatenate(
        [params["res_w1t"], params["res_w2t"], params["disc_wbt"],
         params["res_b1"], pad, params["res_b2"], pad], axis=0)     # [3Fo+16, Fo]
    x2 = jnp.concatenate([feat, feat_a], axis=0)                    # [2N, Fi]
    adj2 = jnp.concatenate([adj, adj], axis=0)                      # [2N, N] (stacked mask)

    vmem = pl.BlockSpec(memory_space=pltpu.MemorySpace.VMEM)
    smem = pl.BlockSpec(memory_space=pltpu.MemorySpace.SMEM)

    hiden, h, scores = pl.pallas_call(
        _encoder_kernel,
        out_shape=(
            jax.ShapeDtypeStruct((N, Fo), jnp.float32),   # hiden_emb
            jax.ShapeDtypeStruct((N, Fi), jnp.float32),   # h
            jax.ShapeDtypeStruct((N, 4), jnp.float32),    # [ret | ret_a]
        ),
        in_specs=[vmem] * 6 + [smem],
        out_specs=(vmem, vmem, vmem),
        compiler_params=pltpu.CompilerParams(vmem_limit_bytes=32 * 1024 * 1024),
    )(x2, adj2, graph_neigh, wproj, wcol, params["weight2"], params["disc_b"])

    ret = scores[:, 0:2]
    ret_a = scores[:, 2:4]
    return hiden, h, ret, ret_a


def init_params(key, in_features, out_features):
    """Deterministic synthetic init mirroring the module's parameter shapes."""
    ks = jax.random.split(key, 10)

    def xavier(k, shape):
        bound = jnp.sqrt(6.0 / (shape[0] + shape[1]))
        return jax.random.uniform(k, shape, jnp.float32, -bound, bound)

    weight1 = xavier(ks[0], (in_features, out_features))
    weight2 = xavier(ks[1], (out_features, in_features))
    att_W = xavier(ks[2], (out_features, out_features))
    a_src = xavier(ks[3], (out_features, 1))
    a_dst = xavier(ks[4], (out_features, 1))
    # ResidualLayer Linears (stored pre-transposed: y = x @ W + b)
    lim = 1.0 / jnp.sqrt(out_features)
    rw1 = jax.random.uniform(ks[5], (out_features, out_features), jnp.float32, -lim, lim)
    rb1 = jax.random.uniform(ks[6], (1, out_features), jnp.float32, -lim, lim)
    rw2 = jax.random.uniform(ks[7], (out_features, out_features), jnp.float32, -lim, lim)
    rb2 = jax.random.uniform(ks[8], (1, out_features), jnp.float32, -lim, lim)
    # Discriminator nn.Bilinear(n_h, n_h, 1): xavier weight, zero bias
    wb0 = xavier(ks[9], (out_features, out_features))
    return dict(
        weight1=weight1, weight2=weight2,
        att_W=att_W, att_a_src=a_src, att_a_dst=a_dst,
        res_w1t=rw1, res_b1=rb1, res_w2t=rw2, res_b2=rb2,
        disc_wbt=wb0.T, disc_b=jnp.zeros((1, 1), jnp.float32),
    )


def reference(feat, feat_a, adj, graph_neigh, params):
    """Pure-JAX reference mirroring the PyTorch forward (dropout p=0)."""
    w1, w2 = params["weight1"], params["weight2"]
    W, a_src, a_dst = params["att_W"], params["att_a_src"], params["att_a_dst"]
    rw1, rb1 = params["res_w1t"], params["res_b1"]
    rw2, rb2 = params["res_w2t"], params["res_b2"]
    wbt, bb = params["disc_wbt"], params["disc_b"][0, 0]

    def attention(hh):
        wh = hh @ W
        e = (wh @ a_src) + (wh @ a_dst).T
        e = jnp.where(e > 0, e, 0.2 * e)
        e = jnp.where(adj > 0, e, -9e15)
        att = jax.nn.softmax(e, axis=1)
        return att @ wh

    def residual(xx):
        out = jnp.maximum(xx @ rw1 + rb1, 0.0) @ rw2 + rb2
        return jnp.maximum(out + xx, 0.0)

    def read(emb):
        vsum = graph_neigh @ emb
        ge = vsum / jnp.sum(graph_neigh, axis=1, keepdims=True)
        nrm = jnp.sqrt(jnp.sum(ge * ge, axis=1, keepdims=True))
        return ge / jnp.maximum(nrm, 1e-12)

    def disc(c, h_pl, h_mi):
        t = c @ wbt
        sc1 = jnp.sum(h_pl * t, axis=1, keepdims=True) + bb
        sc2 = jnp.sum(h_mi * t, axis=1, keepdims=True) + bb
        return jnp.concatenate([sc1, sc2], axis=1)

    z = residual(attention(feat @ w1))
    hiden = z
    h = adj @ (z @ w2)
    emb = jnp.maximum(z, 0.0)
    z_a = residual(attention(feat_a @ w1))
    emb_a = jnp.maximum(z_a, 0.0)
    g = jax.nn.sigmoid(read(emb))
    g_a = jax.nn.sigmoid(read(emb_a))
    return hiden, h, disc(g, emb, emb_a), disc(g_a, emb_a, emb)


if __name__ == "__main__":
    N, Fi, Fo = 16, 64, 32          # nodes, in_features, out_features
    key = jax.random.PRNGKey(0)
    k1, k2, k3, k4, kp = jax.random.split(key, 5)

    feat = jax.random.normal(k1, (N, Fi), jnp.float32)
    feat_a = jax.random.normal(k2, (N, Fi), jnp.float32)
    adj = (jax.random.uniform(k3, (N, N)) > 0.6).astype(jnp.float32)
    adj = jnp.maximum(adj, jnp.eye(N, dtype=jnp.float32))          # self loops
    graph_neigh = (jax.random.uniform(k4, (N, N)) > 0.5).astype(jnp.float32)
    graph_neigh = jnp.maximum(graph_neigh, jnp.eye(N, dtype=jnp.float32))

    params = init_params(kp, Fi, Fo)

    outs = encoder_forward(feat, feat_a, adj, graph_neigh, params)
    outs = jax.block_until_ready(outs)
    hiden, h, ret, ret_a = outs

    refs = reference(feat, feat_a, adj, graph_neigh, params)

    assert hiden.shape == (N, Fo) and h.shape == (N, Fi)
    assert ret.shape == (N, 2) and ret_a.shape == (N, 2)
    for name, a, b in zip(("hiden_emb", "h", "ret", "ret_a"), outs, refs):
        err = float(jnp.max(jnp.abs(a - b)) / (jnp.max(jnp.abs(b)) + 1e-6))
        assert err < 2e-2, (name, err)

    print("KERNEL_OK")
</pallas_src>

<mosaic_0001>
module attributes {stable_mosaic.version = 11 : i64} {
  func.func @_encoder_kernel(%arg0: memref<32x64xf32, #tpu.memory_space<vmem>>, %arg1: memref<32x16xf32, #tpu.memory_space<vmem>>, %arg2: memref<16x16xf32, #tpu.memory_space<vmem>>, %arg3: memref<64x34xf32, #tpu.memory_space<vmem>>, %arg4: memref<112x32xf32, #tpu.memory_space<vmem>>, %arg5: memref<32x64xf32, #tpu.memory_space<vmem>>, %arg6: memref<1x1xf32, #tpu.memory_space<smem>>, %arg7: memref<16x32xf32, #tpu.memory_space<vmem>>, %arg8: memref<16x64xf32, #tpu.memory_space<vmem>>, %arg9: memref<16x4xf32, #tpu.memory_space<vmem>>) attributes {dimension_semantics = [], scalar_prefetch = 0 : i64, scratch_operands = 0 : i64, tpu.core_type = #tpu.core_type<tc>} {
    %c0 = arith.constant 0 : index
    %c0_0 = arith.constant 0 : index
    %0 = vector.load %arg0[%c0, %c0_0] : memref<32x64xf32, #tpu.memory_space<vmem>>, vector<32x64xf32>
    %c0_1 = arith.constant 0 : index
    %c0_2 = arith.constant 0 : index
    %1 = vector.load %arg1[%c0_1, %c0_2] : memref<32x16xf32, #tpu.memory_space<vmem>>, vector<32x16xf32>
    %c0_3 = arith.constant 0 : index
    %c0_4 = arith.constant 0 : index
    %2 = vector.load %arg3[%c0_3, %c0_4] : memref<64x34xf32, #tpu.memory_space<vmem>>, vector<64x34xf32>
    %cst = arith.constant dense<0.000000e+00> : vector<32x34xf32>
    %3 = tpu.matmul %0, %2, %cst {dimension_numbers = #tpu.dot_dimension_numbers<[1], [0], [0], [1], [0, 0, 1, 1], [], []>} : vector<32x64xf32>, vector<64x34xf32>, vector<32x34xf32> -> vector<32x34xf32>
    %4 = vector.extract_strided_slice %3 {offsets = [0, 0], sizes = [32, 32], strides = [1, 1]} : vector<32x34xf32> to vector<32x32xf32>
    %5 = vector.extract_strided_slice %3 {offsets = [0, 32], sizes = [32, 1], strides = [1, 1]} : vector<32x34xf32> to vector<32x1xf32>
    %6 = vector.extract_strided_slice %3 {offsets = [0, 33], sizes = [32, 1], strides = [1, 1]} : vector<32x34xf32> to vector<32x1xf32>
    %7 = tpu.transpose %6, [1, 0] : vector<32x1xf32> -> vector<1x32xf32>
    %8 = tpu.iota {dimensions = array<i32: 0>} : vector<32x1xi32>
    %c16_i32 = arith.constant 16 : i32
    %9 = vector.broadcast %c16_i32 : i32 to vector<32x1xi32>
    %10 = arith.cmpi slt, %8, %9 : vector<32x1xi32>
    %11 = vector.extract_strided_slice %7 {offsets = [0, 0], sizes = [1, 16], strides = [1, 1]} : vector<1x32xf32> to vector<1x16xf32>
    %12 = vector.extract_strided_slice %7 {offsets = [0, 16], sizes = [1, 16], strides = [1, 1]} : vector<1x32xf32> to vector<1x16xf32>
    %13 = vector.shape_cast %10 : vector<32x1xi1> to vector<32x1xi1>
    %14 = vector.broadcast %13 : vector<32x1xi1> to vector<32x16xi1>
    %15 = vector.shape_cast %11 : vector<1x16xf32> to vector<1x16xf32>
    %16 = vector.broadcast %15 : vector<1x16xf32> to vector<32x16xf32>
    %17 = vector.shape_cast %12 : vector<1x16xf32> to vector<1x16xf32>
    %18 = vector.broadcast %17 : vector<1x16xf32> to vector<32x16xf32>
    %19 = arith.select %14, %16, %18 : vector<32x16xi1>, vector<32x16xf32>
    %20 = vector.broadcast %5 : vector<32x1xf32> to vector<32x16xf32>
    %21 = arith.addf %20, %19 : vector<32x16xf32>
    %cst_5 = arith.constant 2.000000e-01 : f32
    %22 = vector.broadcast %cst_5 : f32 to vector<32x16xf32>
    %23 = arith.mulf %22, %21 : vector<32x16xf32>
    %24 = arith.maximumf %21, %23 : vector<32x16xf32>
    %cst_6 = arith.constant 0.000000e+00 : f32
    %25 = vector.broadcast %cst_6 : f32 to vector<32x16xf32>
    %26 = arith.cmpf ogt, %1, %25 : vector<32x16xf32>
    %cst_7 = arith.constant -9.000000e+15 : f32
    %27 = vector.broadcast %cst_7 : f32 to vector<32x16xf32>
    %28 = arith.select %26, %24, %27 : vector<32x16xi1>, vector<32x16xf32>
    %cst_8 = arith.constant dense<0xFF800000> : vector<32xf32>
    %29 = vector.multi_reduction <maximumf>, %28, %cst_8 [1] : vector<32x16xf32> to vector<32xf32>
    %30 = vector.shape_cast %29 : vector<32xf32> to vector<32x1xf32>
    %31 = vector.broadcast %30 : vector<32x1xf32> to vector<32x16xf32>
    %32 = arith.subf %28, %31 : vector<32x16xf32>
    %33 = math.exp %32 : vector<32x16xf32>
    %cst_9 = arith.constant 1.000000e+00 : f32
    %34 = vector.broadcast %cst_9 : f32 to vector<16x1xf32>
    %cst_10 = arith.constant dense<0.000000e+00> : vector<32x1xf32>
    %35 = tpu.matmul %33, %34, %cst_10 {dimension_numbers = #tpu.dot_dimension_numbers<[1], [0], [0], [1], [0, 0, 1, 1], [], []>} : vector<32x16xf32>, vector<16x1xf32>, vector<32x1xf32> -> vector<32x1xf32>
    %36 = vector.extract_strided_slice %33 {offsets = [0, 0], sizes = [16, 16], strides = [1, 1]} : vector<32x16xf32> to vector<16x16xf32>
    %37 = vector.extract_strided_slice %4 {offsets = [0, 0], sizes = [16, 32], strides = [1, 1]} : vector<32x32xf32> to vector<16x32xf32>
    %cst_11 = arith.constant dense<0.000000e+00> : vector<16x32xf32>
    %38 = tpu.matmul %36, %37, %cst_11 {dimension_numbers = #tpu.dot_dimension_numbers<[1], [0], [0], [1], [0, 0, 1, 1], [], []>} : vector<16x16xf32>, vector<16x32xf32>, vector<16x32xf32> -> vector<16x32xf32>
    %39 = vector.extract_strided_slice %33 {offsets = [16, 0], sizes = [16, 16], strides = [1, 1]} : vector<32x16xf32> to vector<16x16xf32>
    %40 = vector.extract_strided_slice %4 {offsets = [16, 0], sizes = [16, 32], strides = [1, 1]} : vector<32x32xf32> to vector<16x32xf32>
    %cst_12 = arith.constant dense<0.000000e+00> : vector<16x32xf32>
    %41 = tpu.matmul %39, %40, %cst_12 {dimension_numbers = #tpu.dot_dimension_numbers<[1], [0], [0], [1], [0, 0, 1, 1], [], []>} : vector<16x16xf32>, vector<16x32xf32>, vector<16x32xf32> -> vector<16x32xf32>
    %42 = tpu.concatenate %38, %41 in 0 : vector<16x32xf32>, vector<16x32xf32> -> vector<32x32xf32>
    %43 = tpu.reciprocal %35 {approx = true} : vector<32x1xf32> -> vector<32x1xf32>
    %44 = vector.broadcast %43 : vector<32x1xf32> to vector<32x32xf32>
    %45 = arith.mulf %42, %44 : vector<32x32xf32>
    %c0_13 = arith.constant 0 : index
    %c0_14 = arith.constant 0 : index
    %46 = vector.load %arg4[%c0_13, %c0_14] : memref<112x32xf32, #tpu.memory_space<vmem>>, vector<32x32xf32>
    %c32 = arith.constant 32 : index
    %c0_15 = arith.constant 0 : index
    %47 = vector.load %arg4[%c32, %c0_15] : memref<112x32xf32, #tpu.memory_space<vmem>>, vector<32x32xf32>
    %c64 = arith.constant 64 : index
    %c0_16 = arith.constant 0 : index
    %48 = vector.load %arg4[%c64, %c0_16] : memref<112x32xf32, #tpu.memory_space<vmem>>, vector<32x32xf32>
    %c96 = arith.constant 96 : index
    %c0_17 = arith.constant 0 : index
    %49 = vector.load %arg4[%c96, %c0_17] : memref<112x32xf32, #tpu.memory_space<vmem>>, vector<1x32xf32>
    %c104 = arith.constant 104 : index
    %c0_18 = arith.constant 0 : index
    %50 = vector.load %arg4[%c104, %c0_18] : memref<112x32xf32, #tpu.memory_space<vmem>>, vector<1x32xf32>
    %cst_19 = arith.constant dense<0.000000e+00> : vector<32x32xf32>
    %51 = tpu.matmul %45, %46, %cst_19 {dimension_numbers = #tpu.dot_dimension_numbers<[1], [0], [0], [1], [0, 0, 1, 1], [], []>} : vector<32x32xf32>, vector<32x32xf32>, vector<32x32xf32> -> vector<32x32xf32>
    %52 = vector.broadcast %49 : vector<1x32xf32> to vector<32x32xf32>
    %53 = arith.addf %51, %52 : vector<32x32xf32>
    %cst_20 = arith.constant 0.000000e+00 : f32
    %54 = vector.broadcast %cst_20 : f32 to vector<32x32xf32>
    %55 = arith.maximumf %53, %54 : vector<32x32xf32>
    %cst_21 = arith.constant dense<0.000000e+00> : vector<32x32xf32>
    %56 = tpu.matmul %55, %47, %cst_21 {dimension_numbers = #tpu.dot_dimension_numbers<[1], [0], [0], [1], [0, 0, 1, 1], [], []>} : vector<32x32xf32>, vector<32x32xf32>, vector<32x32xf32> -> vector<32x32xf32>
    %57 = vector.broadcast %50 : vector<1x32xf32> to vector<32x32xf32>
    %58 = arith.addf %56, %57 : vector<32x32xf32>
    %59 = arith.addf %58, %45 : vector<32x32xf32>
    %cst_22 = arith.constant 0.000000e+00 : f32
    %60 = vector.broadcast %cst_22 : f32 to vector<32x32xf32>
    %61 = arith.maximumf %59, %60 : vector<32x32xf32>
    %62 = vector.extract_strided_slice %61 {offsets = [0, 0], sizes = [16, 32], strides = [1, 1]} : vector<32x32xf32> to vector<16x32xf32>
    %c0_23 = arith.constant 0 : index
    %c0_24 = arith.constant 0 : index
    %63 = vector.load %arg7[%c0_23, %c0_24] : memref<16x32xf32, #tpu.memory_space<vmem>>, vector<16x32xf32>
    tpu.vector_store %arg7[%c0_23, %c0_24], %62 {strides = array<i32>} : memref<16x32xf32, #tpu.memory_space<vmem>>, vector<16x32xf32>,
    %64 = vector.extract_strided_slice %1 {offsets = [0, 0], sizes = [16, 16], strides = [1, 1]} : vector<32x16xf32> to vector<16x16xf32>
    %c0_25 = arith.constant 0 : index
    %c0_26 = arith.constant 0 : index
    %65 = vector.load %arg5[%c0_25, %c0_26] : memref<32x64xf32, #tpu.memory_space<vmem>>, vector<32x64xf32>
    %cst_27 = arith.constant dense<0.000000e+00> : vector<16x64xf32>
    %66 = tpu.matmul %62, %65, %cst_27 {dimension_numbers = #tpu.dot_dimension_numbers<[1], [0], [0], [1], [0, 0, 1, 1], [], []>} : vector<16x32xf32>, vector<32x64xf32>, vector<16x64xf32> -> vector<16x64xf32>
    %cst_28 = arith.constant dense<0.000000e+00> : vector<16x64xf32>
    %67 = tpu.matmul %64, %66, %cst_28 {dimension_numbers = #tpu.dot_dimension_numbers<[1], [0], [0], [1], [0, 0, 1, 1], [], []>} : vector<16x16xf32>, vector<16x64xf32>, vector<16x64xf32> -> vector<16x64xf32>
    %c0_29 = arith.constant 0 : index
    %c0_30 = arith.constant 0 : index
    %68 = vector.load %arg8[%c0_29, %c0_30] : memref<16x64xf32, #tpu.memory_space<vmem>>, vector<16x64xf32>
    tpu.vector_store %arg8[%c0_29, %c0_30], %67 {strides = array<i32>} : memref<16x64xf32, #tpu.memory_space<vmem>>, vector<16x64xf32>,
    %69 = vector.extract_strided_slice %61 {offsets = [16, 0], sizes = [16, 32], strides = [1, 1]} : vector<32x32xf32> to vector<16x32xf32>
    %cst_31 = arith.constant 1.000000e+00 : f32
    %70 = vector.broadcast %cst_31 : f32 to vector<16x1xf32>
    %71 = tpu.concatenate %62, %69, %70 in 1 : vector<16x32xf32>, vector<16x32xf32>, vector<16x1xf32> -> vector<16x65xf32>
    %c0_32 = arith.constant 0 : index
    %c0_33 = arith.constant 0 : index
    %72 = vector.load %arg2[%c0_32, %c0_33] : memref<16x16xf32, #tpu.memory_space<vmem>>, vector<16x16xf32>
    %cst_34 = arith.constant dense<0.000000e+00> : vector<16x65xf32>
    %73 = tpu.matmul %72, %71, %cst_34 {dimension_numbers = #tpu.dot_dimension_numbers<[1], [0], [0], [1], [0, 0, 1, 1], [], []>} : vector<16x16xf32>, vector<16x65xf32>, vector<16x65xf32> -> vector<16x65xf32>
    %74 = vector.extract_strided_slice %73 {offsets = [0, 64], sizes = [16, 1], strides = [1, 1]} : vector<16x65xf32> to vector<16x1xf32>
    %cst_35 = arith.constant 9.99999996E-13 : f32
    %75 = vector.broadcast %cst_35 : f32 to vector<16x1xf32>
    %76 = arith.maximumf %74, %75 : vector<16x1xf32>
    %77 = tpu.reciprocal %76 {approx = true} : vector<16x1xf32> -> vector<16x1xf32>
    %78 = vector.extract_strided_slice %73 {offsets = [0, 0], sizes = [16, 32], strides = [1, 1]} : vector<16x65xf32> to vector<16x32xf32>
    %79 = vector.broadcast %77 : vector<16x1xf32> to vector<16x32xf32>
    %80 = arith.mulf %78, %79 : vector<16x32xf32>
    %81 = arith.mulf %80, %80 : vector<16x32xf32>
    %cst_36 = arith.constant dense<0.000000e+00> : vector<16xf32>
    %82 = vector.multi_reduction <add>, %81, %cst_36 [1] : vector<16x32xf32> to vector<16xf32>
    %83 = vector.shape_cast %82 : vector<16xf32> to vector<16x1xf32>
    %cst_37 = arith.constant 1.000000e-24 : f32
    %84 = vector.broadcast %cst_37 : f32 to vector<16x1xf32>
    %85 = arith.maximumf %83, %84 : vector<16x1xf32>
    %86 = math.rsqrt %85 : vector<16x1xf32>
    %87 = vector.broadcast %86 : vector<16x1xf32> to vector<16x32xf32>
    %88 = arith.mulf %80, %87 : vector<16x32xf32>
    %89 = arith.negf %88 : vector<16x32xf32>
    %90 = math.exp %89 : vector<16x32xf32>
    %cst_38 = arith.constant 1.000000e+00 : f32
    %91 = vector.broadcast %cst_38 : f32 to vector<16x32xf32>
    %92 = arith.addf %91, %90 : vector<16x32xf32>
    %93 = arith.divf %91, %92 : vector<16x32xf32>
    %94 = vector.extract_strided_slice %73 {offsets = [0, 32], sizes = [16, 32], strides = [1, 1]} : vector<16x65xf32> to vector<16x32xf32>
    %95 = vector.broadcast %77 : vector<16x1xf32> to vector<16x32xf32>
    %96 = arith.mulf %94, %95 : vector<16x32xf32>
    %97 = arith.mulf %96, %96 : vector<16x32xf32>
    %cst_39 = arith.constant dense<0.000000e+00> : vector<16xf32>
    %98 = vector.multi_reduction <add>, %97, %cst_39 [1] : vector<16x32xf32> to vector<16xf32>
    %99 = vector.shape_cast %98 : vector<16xf32> to vector<16x1xf32>
    %cst_40 = arith.constant 1.000000e-24 : f32
    %100 = vector.broadcast %cst_40 : f32 to vector<16x1xf32>
    %101 = arith.maximumf %99, %100 : vector<16x1xf32>
    %102 = math.rsqrt %101 : vector<16x1xf32>
    %103 = vector.broadcast %102 : vector<16x1xf32> to vector<16x32xf32>
    %104 = arith.mulf %96, %103 : vector<16x32xf32>
    %105 = arith.negf %104 : vector<16x32xf32>
    %106 = math.exp %105 : vector<16x32xf32>
    %cst_41 = arith.constant 1.000000e+00 : f32
    %107 = vector.broadcast %cst_41 : f32 to vector<16x32xf32>
    %108 = arith.addf %107, %106 : vector<16x32xf32>
    %109 = arith.divf %107, %108 : vector<16x32xf32>
    %110 = tpu.concatenate %93, %109 in 0 : vector<16x32xf32>, vector<16x32xf32> -> vector<32x32xf32>
    %cst_42 = arith.constant dense<0.000000e+00> : vector<32x32xf32>
    %111 = tpu.matmul %110, %48, %cst_42 {dimension_numbers = #tpu.dot_dimension_numbers<[1], [0], [0], [1], [0, 0, 1, 1], [], []>} : vector<32x32xf32>, vector<32x32xf32>, vector<32x32xf32> -> vector<32x32xf32>
    %c16_i32_43 = arith.constant 16 : i32
    %112 = tpu.dynamic_rotate %111 by %c16_i32_43 dim 0 : vector<32x32xf32>, i32 -> vector<32x32xf32>
    %113 = arith.mulf %61, %111 : vector<32x32xf32>
    %cst_44 = arith.constant dense<0.000000e+00> : vector<32xf32>
    %114 = vector.multi_reduction <add>, %113, %cst_44 [1] : vector<32x32xf32> to vector<32xf32>
    %115 = vector.shape_cast %114 : vector<32xf32> to vector<32x1xf32>
    %116 = arith.mulf %61, %112 : vector<32x32xf32>
    %cst_45 = arith.constant dense<0.000000e+00> : vector<32xf32>
    %117 = vector.multi_reduction <add>, %116, %cst_45 [1] : vector<32x32xf32> to vector<32xf32>
    %118 = vector.shape_cast %117 : vector<32xf32> to vector<32x1xf32>
    %c0_46 = arith.constant 0 : index
    %c0_47 = arith.constant 0 : index
    %119 = memref.load %arg6[%c0_46, %c0_47] : memref<1x1xf32, #tpu.memory_space<smem>>
    %120 = vector.extract_strided_slice %115 {offsets = [0, 0], sizes = [16, 1], strides = [1, 1]} : vector<32x1xf32> to vector<16x1xf32>
    %121 = vector.extract_strided_slice %118 {offsets = [16, 0], sizes = [16, 1], strides = [1, 1]} : vector<32x1xf32> to vector<16x1xf32>
    %122 = vector.extract_strided_slice %115 {offsets = [16, 0], sizes = [16, 1], strides = [1, 1]} : vector<32x1xf32> to vector<16x1xf32>
    %123 = vector.extract_strided_slice %118 {offsets = [0, 0], sizes = [16, 1], strides = [1, 1]} : vector<32x1xf32> to vector<16x1xf32>
    %124 = tpu.concatenate %120, %121, %122, %123 in 1 : vector<16x1xf32>, vector<16x1xf32>, vector<16x1xf32>, vector<16x1xf32> -> vector<16x4xf32>
    %125 = vector.broadcast %119 : f32 to vector<16x4xf32>
    %126 = arith.addf %124, %125 : vector<16x4xf32>
    %c0_48 = arith.constant 0 : index
    %c0_49 = arith.constant 0 : index
    %127 = vector.load %arg9[%c0_48, %c0_49] : memref<16x4xf32, #tpu.memory_space<vmem>>, vector<16x4xf32>
    tpu.vector_store %arg9[%c0_48, %c0_49], %126 {strides = array<i32>} : memref<16x4xf32, #tpu.memory_space<vmem>>, vector<16x4xf32>,
    return
  }
}

</mosaic_0001>

<llo_original>
// kernel: tpu_custom_call.1
$region0: #{tpu_custom_call.1}
  #allocation0 [shape = 'u32[]', space=smem, size = 0x4, offset = 0x4, fixed_abs, tag = 'smem constant byte address 0x4 - core index']
  #allocation1 [shape = 'u32[144,128]{1,0:T(1,128)}', space=vmem, size = 0x12000, scoped, tag = 'internal scratch']
  #allocation2 [shape = 'f32[1,1]{1,0:T(1,128)S(6)}', space=smem, size = 0x200, scoped, tag = 'scoped memory for tpu_custom_call.1']
  %s0 = inlined_call_operand.vmem [shape: f32[32,64], index: 0, kind: input, shape index: {}]
  %s1 = inlined_call_operand.vmem [shape: f32[32,16], index: 1, kind: input, shape index: {}]
  %s2 = inlined_call_operand.vmem [shape: f32[16,16], index: 2, kind: input, shape index: {}]
  %s3 = inlined_call_operand.vmem [shape: f32[64,34], index: 3, kind: input, shape index: {}]
  %s4 = inlined_call_operand.vmem [shape: f32[112,32], index: 4, kind: input, shape index: {}]
  %s5 = inlined_call_operand.vmem [shape: f32[32,64], index: 5, kind: input, shape index: {}]
  %s6 = inlined_call_operand.<no memory space> [shape: f32[1,1], index: 6, kind: input, shape index: {}]
  %s7 = inlined_call_operand.hbm [shape: f32[16,32], index: 7, kind: output, shape index: {0}]
  %s8 = inlined_call_operand.hbm [shape: f32[16,64], index: 8, kind: output, shape index: {1}]
  %s9 = inlined_call_operand.vmem [shape: f32[16,4], index: 9, kind: output, shape index: {2}]
  %10 = xla_tuple %s7, %s8, %s9
  %s11 = sld [smem:[#allocation0]]
  $region54: #{tpu_custom_call.1} parent=0
    _
  %s13 = ssub.s32 1, %s11
  %s14 = scalar_select 0, %s13, %s11
  %15 = sst [smem:[#allocation2]] %s6
  $region1: #{tpu_custom_call.1} parent=0
    #allocation3 [shape = 'u8[8192]{0}', space=vmem, size = 0x2000, scoped, tag = 'output window, operand 0, single buffered']
    #allocation4 [shape = 's32[1]{0}', space=sflag, size = 0x4, scoped, tag = 'scoped memory for tpu_custom_call.1']
    #allocation5 [shape = 'u8[8192]{0}', space=vmem, size = 0x2000, scoped, tag = 'output window, operand 1, single buffered']
    #allocation6 [shape = 's32[1]{0}', space=sflag, size = 0x4, scoped, tag = 'scoped memory for tpu_custom_call.1']
    %16 = vsyncpa [#allocation4], 0
    %17 = vsyncpa [#allocation6], 0
    // Predicated region
    $region2: #{tpu_custom_call.1} parent=1 // pred_check
      _
    $region3: #{tpu_custom_call.1} parent=1 // pred_check_branch
      %19 = sbr.rel (0) target = $region5
    $region4: #{tpu_custom_call.1} parent=1 // pred_region
      _
    $region5: #{tpu_custom_call.1} parent=1 // pred_fallthru
      _
    // Predicated region
    $region6: #{tpu_custom_call.1} parent=1 // pred_check
      _
    $region7: #{tpu_custom_call.1} parent=1 // pred_check_branch
      %21 = sbr.rel (0) target = $region9
    $region8: #{tpu_custom_call.1} parent=1 // pred_region
      _
    $region9: #{tpu_custom_call.1} parent=1 // pred_fallthru
      _
    // Predicated region
    $region10: #{tpu_custom_call.1} parent=1 // pred_check
      _
    $region11: #{tpu_custom_call.1} parent=1 // pred_check_branch
      %23 = sbr.rel (0) target = $region13
    $region12: #{tpu_custom_call.1} parent=1 // pred_region
      _
    $region13: #{tpu_custom_call.1} parent=1 // pred_fallthru
      _
    // Predicated region
    $region14: #{tpu_custom_call.1} parent=1 // pred_check
      _
    $region15: #{tpu_custom_call.1} parent=1 // pred_check_branch
      %25 = sbr.rel (0) target = $region17
    $region16: #{tpu_custom_call.1} parent=1 // pred_region
      _
    $region17: #{tpu_custom_call.1} parent=1 // pred_fallthru
      _
    // Predicated region
    $region18: #{tpu_custom_call.1} parent=1 // pred_check
      _
    $region19: #{tpu_custom_call.1} parent=1 // pred_check_branch
      %27 = sbr.rel (0) target = $region21
    $region20: #{tpu_custom_call.1} parent=1 // pred_region
      _
    $region21: #{tpu_custom_call.1} parent=1 // pred_fallthru
      _
    // Predicated region
    $region22: #{tpu_custom_call.1} parent=1 // pred_check
      _
    $region23: #{tpu_custom_call.1} parent=1 // pred_check_branch
      %29 = sbr.rel (0) target = $region25
    $region24: #{tpu_custom_call.1} parent=1 // pred_region
      _
    $region25: #{tpu_custom_call.1} parent=1 // pred_fallthru
      _
    // Predicated region
    $region26: #{tpu_custom_call.1} parent=1 // pred_check
      _
    $region27: #{tpu_custom_call.1} parent=1 // pred_check_branch
      %31 = sbr.rel (0) target = $region29
    $region28: #{tpu_custom_call.1} parent=1 // pred_region
      _
    $region29: #{tpu_custom_call.1} parent=1 // pred_fallthru
      _
    %v32 = vld [vmem:[%s0] sm:$0xff]
    %v33 = vld [vmem:[%s0 + $0x8] sm:$0xff]
    %v34 = vld [vmem:[%s0 + $0x10] sm:$0xff]
    %v35 = vld [vmem:[%s0 + $0x18] sm:$0xff]
    %v36 = vld [vmem:[%s1] sm:$0xff]
    %v37 = vld [vmem:[%s1 + $0x8] sm:$0xff]
    %v38 = vld [vmem:[%s1 + $0x10] sm:$0xff]
    %v39 = vld [vmem:[%s1 + $0x18] sm:$0xff]
    %v40 = vld [vmem:[%s3] sm:$0xff]
    %v41 = vld [vmem:[%s3 + $0x8] sm:$0xff]
    %v42 = vld [vmem:[%s3 + $0x10] sm:$0xff]
    %v43 = vld [vmem:[%s3 + $0x18] sm:$0xff]
    %v44 = vld [vmem:[%s3 + $0x20] sm:$0xff]
    %v45 = vld [vmem:[%s3 + $0x28] sm:$0xff]
    %v46 = vld [vmem:[%s3 + $0x30] sm:$0xff]
    %v47 = vld [vmem:[%s3 + $0x38] sm:$0xff]
    %vm48 = vcmask 523264
    %v50 = vsel %vm48, %v32, 0
    %v53 = vsel %vm48, %v33, 0
    %v56 = vsel %vm48, %v34, 0
    %v59 = vsel %vm48, %v35, 0
    %61 = vmatprep.subr.mxu0 0.0
    %62 = vmatpush1.msra.mxu0 0.0
    %63 = vmatprep.subr.mxu0 0.0
    %64 = vmatpush1.msra.mxu0 0.0
    %65 = vmatprep.subr.mxu0 0.0
    %66 = vmatpush1.msra.mxu0 0.0
    %67 = vmatprep.subr.mxu0 0.0
    %68 = vmatpush1.msra.mxu0 0.0
    %69 = vmatprep.subr.mxu0 0.0
    %70 = vmatpush1.msra.mxu0 0.0
    %71 = vmatprep.subr.mxu0 0.0
    %72 = vmatpush1.msra.mxu0 0.0
    %73 = vmatprep.subr.mxu0 0.0
    %74 = vmatpush1.msra.mxu0 0.0
    %75 = vmatprep.subr.mxu0 0.0
    %76 = vmatpush1.msra.mxu0 0.0
    %77 = vmatprep.subr.mxu0 0.0
    %78 = vmatpush1.msra.mxu0 %v47
    %79 = vmatprep.subr.mxu0 0.0
    %80 = vmatpush1.msra.mxu0 %v46
    %81 = vmatprep.subr.mxu0 0.0
    %82 = vmatpush1.msra.mxu0 %v45
    %83 = vmatprep.subr.mxu0 0.0
    %84 = vmatpush1.msra.mxu0 %v44
    %85 = vmatprep.subr.mxu0 0.0
    %86 = vmatpush1.msra.mxu0 %v43
    %87 = vmatprep.subr.mxu0 0.0
    %88 = vmatpush1.msra.mxu0 %v42
    %89 = vmatprep.subr.mxu0 0.0
    %90 = vmatpush1.msra.mxu0 %v41
    %91 = vmatprep.subr.mxu0 0.0
    %92 = vmatpush1.msra.mxu0 %v40
    %93 = vmatprep.subr.mxu0 0.0
    %94 = vmatpush2.msra.mxu0 0.0
    %95 = vmatprep.subr.mxu0 0.0
    %96 = vmatpush2.msra.mxu0 0.0
    %97 = vmatprep.subr.mxu0 0.0
    %98 = vmatpush2.msra.mxu0 0.0
    %99 = vmatprep.subr.mxu0 0.0
    %100 = vmatpush2.msra.mxu0 0.0
    %101 = vmatprep.subr.mxu0 0.0
    %102 = vmatpush2.msra.mxu0 0.0
    %103 = vmatprep.subr.mxu0 0.0
    %104 = vmatpush2.msra.mxu0 0.0
    %105 = vmatprep.subr.mxu0 0.0
    %106 = vmatpush2.msra.mxu0 0.0
    %107 = vmatprep.subr.mxu0 0.0
    %108 = vmatpush2.msra.mxu0 0.0
    %109 = vmatprep.subr.mxu0 0.0
    %110 = vmatpush2.msra.mxu0 0.0
    %111 = vmatprep.subr.mxu0 0.0
    %112 = vmatpush2.msra.mxu0 0.0
    %113 = vmatprep.subr.mxu0 0.0
    %114 = vmatpush2.msra.mxu0 0.0
    %115 = vmatprep.subr.mxu0 0.0
    %116 = vmatpush2.msra.mxu0 0.0
    %117 = vmatprep.subr.mxu0 0.0
    %118 = vmatpush2.msra.mxu0 0.0
    %119 = vmatprep.subr.mxu0 0.0
    %120 = vmatpush2.msra.mxu0 0.0
    %121 = vmatprep.subr.mxu0 0.0
    %122 = vmatpush2.msra.mxu0 0.0
    %123 = vmatprep.subr.mxu0 0.0
    %124 = vmatpush2.msra.mxu0 0.0
    %125 = vmatprep.mubr.f32.mxu0 0.0
    %126 = vmatmul.mubr.f32.gmra.mxu0 %v50
    %v127 = vpop.f32.mrf.mxu0
    %v128 = vadd.f32 0.0, %v127
    %v129 = vpop.f32.mrf.mxu0
    %130 = vmatprep.mubr.f32.mxu0 0.0
    %131 = vmatmul.mubr.f32.gmra.mxu0 %v53
    %v132 = vpop.f32.mrf.mxu0
    %v133 = vadd.f32 0.0, %v132
    %v134 = vpop.f32.mrf.mxu0
    %135 = vmatprep.mubr.f32.mxu0 0.0
    %136 = vmatmul.mubr.f32.gmra.mxu0 %v56
    %v137 = vpop.f32.mrf.mxu0
    %v138 = vadd.f32 0.0, %v137
    %v139 = vpop.f32.mrf.mxu0
    %140 = vmatprep.mubr.f32.mxu0 0.0
    %141 = vmatmul.mubr.f32.gmra.mxu0 %v59
    %v142 = vpop.f32.mrf.mxu0
    %v143 = vadd.f32 0.0, %v142
    %v144 = vpop.f32.mrf.mxu0
    %145 = vdwg.mxu0
    %150 = vrot.lane.b32.xlu0 %v128, 95
    %v151 = vpop.permute.xlu0 %150
    %152 = vrot.lane.b32.xlu0 %v133, 95
    %v153 = vpop.permute.xlu0 %152
    %154 = vrot.lane.b32.xlu0 %v138, 95
    %v155 = vpop.permute.xlu0 %154
    %156 = vrot.lane.b32.xlu0 %v143, 95
    %v157 = vpop.permute.xlu0 %156
    %162 = vxpose.xlu0.b32.start [1/16] %v151, 128
    %163 = vxpose.xlu0.b32.cont [2/16] %v153, 128
    %164 = vxpose.xlu0.b32.cont [3/16] %v155, 128
    %165 = vxpose.xlu0.b32.cont [4/16] %v157, 128
    %166 = vxpose.xlu0.b32.cont [5/16] 0.0, 128
    %167 = vxpose.xlu0.b32.cont [6/16] 0.0, 128
    %168 = vxpose.xlu0.b32.cont [7/16] 0.0, 128
    %169 = vxpose.xlu0.b32.cont [8/16] 0.0, 128
    %170 = vxpose.xlu0.b32.cont [9/16] 0.0, 128
    %171 = vxpose.xlu0.b32.cont [10/16] 0.0, 128
    %172 = vxpose.xlu0.b32.cont [11/16] 0.0, 128
    %173 = vxpose.xlu0.b32.cont [12/16] 0.0, 128
    %174 = vxpose.xlu0.b32.cont [13/16] 0.0, 128
    %175 = vxpose.xlu0.b32.cont [14/16] 0.0, 128
    %176 = vxpose.xlu0.b32.cont [15/16] 0.0, 128
    %177 = vxpose.xlu0.b32.end [16/16] 0.0, 128
    %v178 = vpop.trf.xlu0
    %v179 = vpop.trf.xlu0
    %v180 = vpop.trf.xlu0
    %v181 = vpop.trf.xlu0
    %v182 = vpop.trf.xlu0
    %v183 = vpop.trf.xlu0
    %v184 = vpop.trf.xlu0
    %v185 = vpop.trf.xlu0
    %v186 = vpop.trf.xlu0
    %v187 = vpop.trf.xlu0
    %v188 = vpop.trf.xlu0
    %v189 = vpop.trf.xlu0
    %v190 = vpop.trf.xlu0
    %v191 = vpop.trf.xlu0
    %v192 = vpop.trf.xlu0
    %v193 = vpop.trf.xlu0
    %v194 = vlaneseq
    %v195 = vshrl.u32 %v194, 7
    %v196 = vadd.s32 %v195, 8
    %v197 = vadd.s32 %v195, 16
    %v198 = vadd.s32 %v195, 24
    %vm199 = vcmp.lt.s32.totalorder %v195, 16
    %vm200 = vcmp.lt.s32.totalorder %v196, 16
    %vm201 = vcmp.lt.s32.totalorder %v197, 16
    %vm202 = vcmp.lt.s32.totalorder %v198, 16
    %v203 = vsel %vm199, 1, 0
    %v204 = vsel %vm200, 1, 0
    %v205 = vsel %vm201, 1, 0
    %v206 = vsel %vm202, 1, 0
    %vm207 = vcmp.eq.s32.totalorder %v203, 1
    %vm208 = vcmp.eq.s32.totalorder %v204, 1
    %vm209 = vcmp.eq.s32.totalorder %v205, 1
    %vm210 = vcmp.eq.s32.totalorder %v206, 1
    %v211 = vlaneseq
    %v212 = vshrl.u32 %v211, 7
    %v213 = vsub.s32 0, %v212
    %v214 = vrot.slane %v178, %v213
    %216 = vrot.lane.b32.xlu0 %v214, 112
    %v217 = vpop.permute.xlu0 %216
    %v219 = vsel %vm207, %v214, %v217
    %v220 = vsel %vm208, %v214, %v217
    %v221 = vsel %vm209, %v214, %v217
    %v222 = vsel %vm210, %v214, %v217
    %223 = vset.pattern.permute.xlu0 32
    %224 = vperm.xlu0 %223, %v128
    %v225 = vpop.permute.xlu0 %224
    %227 = vset.pattern.permute.xlu0 32
    %228 = vperm.xlu0 %227, %v133
    %v229 = vpop.permute.xlu0 %228
    %231 = vset.pattern.permute.xlu0 32
    %232 = vperm.xlu0 %231, %v138
    %v233 = vpop.permute.xlu0 %232
    %235 = vset.pattern.permute.xlu0 32
    %236 = vperm.xlu0 %235, %v143
    %v237 = vpop.permute.xlu0 %236
    %v239 = vadd.f32 %v225, %v219
    %v240 = vadd.f32 %v229, %v220
    %v241 = vadd.f32 %v233, %v221
    %v242 = vadd.f32 %v237, %v222
    %v243 = vmul.f32 %v239, 0.2
    %v244 = vmul.f32 %v240, 0.2
    %v245 = vmul.f32 %v241, 0.2
    %v246 = vmul.f32 %v242, 0.2
    %v247 = vmax.f32 %v239, %v243
    %v248 = vmax.f32 %v240, %v244
    %v249 = vmax.f32 %v241, %v245
    %v250 = vmax.f32 %v242, %v246
    %vm251 = vcmp.gt.f32.partialorder %v36, 0.0
    %vm252 = vcmp.gt.f32.partialorder %v37, 0.0
    %vm253 = vcmp.gt.f32.partialorder %v38, 0.0
    %vm254 = vcmp.gt.f32.partialorder %v39, 0.0
    %v255 = vsel %vm251, %v247, -9e+15
    %v256 = vsel %vm252, %v248, -9e+15
    %v257 = vsel %vm253, %v249, -9e+15
    %v258 = vsel %vm254, %v250, -9e+15
    %vm259 = vcmask 130048
    %v260 = vsel %vm259, %v255, -inf
    %261 = vmax.xlane.f32.xlu0 %v260
    %v262 = vpop.xlane.xlu0 %261
    %v263 = vsel %vm259, %v256, -inf
    %264 = vmax.xlane.f32.xlu0 %v263
    %v265 = vpop.xlane.xlu0 %264
    %v266 = vsel %vm259, %v257, -inf
    %267 = vmax.xlane.f32.xlu0 %v266
    %v268 = vpop.xlane.xlu0 %267
    %v269 = vsel %vm259, %v258, -inf
    %270 = vmax.xlane.f32.xlu0 %v269
    %v271 = vpop.xlane.xlu0 %270
    %v272 = vsub.f32 %v255, %v262
    %v273 = vsub.f32 %v256, %v265
    %v274 = vsub.f32 %v257, %v268
    %v275 = vsub.f32 %v258, %v271
    %v276 = vmul.f32 %v272, 1.442695
    %v277 = vpow.pop %v276
    %v278 = vmul.f32 %v273, 1.442695
    %v279 = vpow.pop %v278
    %v280 = vmul.f32 %v274, 1.442695
    %v281 = vpow.pop %v280
    %v282 = vmul.f32 %v275, 1.442695
    %v283 = vpow.pop %v282
    %v285 = vsel %vm259, %v277, 0
    %v288 = vsel %vm259, %v279, 0
    %v291 = vsel %vm259, %v281, 0
    %v294 = vsel %vm259, %v283, 0
    %296 = vmatprep.subr.mxu0 0.0
    %297 = vmatpush1.msra.mxu0 0.0
    %298 = vmatprep.subr.mxu0 0.0
    %299 = vmatpush1.msra.mxu0 0.0
    %300 = vmatprep.subr.mxu0 0.0
    %301 = vmatpush1.msra.mxu0 0.0
    %302 = vmatprep.subr.mxu0 0.0
    %303 = vmatpush1.msra.mxu0 0.0
    %304 = vmatprep.subr.mxu0 0.0
    %305 = vmatpush1.msra.mxu0 0.0
    %306 = vmatprep.subr.mxu0 0.0
    %307 = vmatpush1.msra.mxu0 0.0
    %308 = vmatprep.subr.mxu0 0.0
    %309 = vmatpush1.msra.mxu0 0.0
    %310 = vmatprep.subr.mxu0 0.0
    %311 = vmatpush1.msra.mxu0 0.0
    %312 = vmatprep.subr.mxu0 0.0
    %313 = vmatpush1.msra.mxu0 0.0
    %314 = vmatprep.subr.mxu0 0.0
    %315 = vmatpush1.msra.mxu0 0.0
    %316 = vmatprep.subr.mxu0 0.0
    %317 = vmatpush1.msra.mxu0 0.0
    %318 = vmatprep.subr.mxu0 0.0
    %319 = vmatpush1.msra.mxu0 0.0
    %320 = vmatprep.subr.mxu0 0.0
    %321 = vmatpush1.msra.mxu0 0.0
    %322 = vmatprep.subr.mxu0 0.0
    %323 = vmatpush1.msra.mxu0 0.0
    %324 = vmatprep.subr.mxu0 0.0
    %325 = vmatpush1.msra.mxu0 1.0
    %326 = vmatprep.subr.mxu0 0.0
    %327 = vmatpush1.msra.mxu0 1.0
    %328 = vmatprep.subr.mxu0 0.0
    %329 = vmatpush2.msra.mxu0 0.0
    %330 = vmatprep.subr.mxu0 0.0
    %331 = vmatpush2.msra.mxu0 0.0
    %332 = vmatprep.subr.mxu0 0.0
    %333 = vmatpush2.msra.mxu0 0.0
    %334 = vmatprep.subr.mxu0 0.0
    %335 = vmatpush2.msra.mxu0 0.0
    %336 = vmatprep.subr.mxu0 0.0
    %337 = vmatpush2.msra.mxu0 0.0
    %338 = vmatprep.subr.mxu0 0.0
    %339 = vmatpush2.msra.mxu0 0.0
    %340 = vmatprep.subr.mxu0 0.0
    %341 = vmatpush2.msra.mxu0 0.0
    %342 = vmatprep.subr.mxu0 0.0
    %343 = vmatpush2.msra.mxu0 0.0
    %344 = vmatprep.subr.mxu0 0.0
    %345 = vmatpush2.msra.mxu0 0.0
    %346 = vmatprep.subr.mxu0 0.0
    %347 = vmatpush2.msra.mxu0 0.0
    %348 = vmatprep.subr.mxu0 0.0
    %349 = vmatpush2.msra.mxu0 0.0
    %350 = vmatprep.subr.mxu0 0.0
    %351 = vmatpush2.msra.mxu0 0.0
    %352 = vmatprep.subr.mxu0 0.0
    %353 = vmatpush2.msra.mxu0 0.0
    %354 = vmatprep.subr.mxu0 0.0
    %355 = vmatpush2.msra.mxu0 0.0
    %356 = vmatprep.subr.mxu0 0.0
    %357 = vmatpush2.msra.mxu0 0.0
    %358 = vmatprep.subr.mxu0 0.0
    %359 = vmatpush2.msra.mxu0 0.0
    %360 = vmatprep.mubr.f32.mxu0 0.0
    %361 = vmatmul.mubr.f32.gmra.mxu0 %v285
    %v362 = vpop.f32.mrf.mxu0
    %v363 = vadd.f32 0.0, %v362
    %v364 = vpop.f32.mrf.mxu0
    %365 = vmatprep.mubr.f32.mxu0 0.0
    %366 = vmatmul.mubr.f32.gmra.mxu0 %v288
    %v367 = vpop.f32.mrf.mxu0
    %v368 = vadd.f32 0.0, %v367
    %v369 = vpop.f32.mrf.mxu0
    %370 = vmatprep.mubr.f32.mxu0 0.0
    %371 = vmatmul.mubr.f32.gmra.mxu0 %v291
    %v372 = vpop.f32.mrf.mxu0
    %v373 = vadd.f32 0.0, %v372
    %v374 = vpop.f32.mrf.mxu0
    %375 = vmatprep.mubr.f32.mxu0 0.0
    %376 = vmatmul.mubr.f32.gmra.mxu0 %v294
    %v377 = vpop.f32.mrf.mxu0
    %v378 = vadd.f32 0.0, %v377
    %v379 = vpop.f32.mrf.mxu0
    %380 = vdwg.mxu0
    %381 = vmatprep.subr.mxu0 0.0
    %382 = vmatpush1.msra.mxu0 0.0
    %383 = vmatprep.subr.mxu0 0.0
    %384 = vmatpush1.msra.mxu0 0.0
    %385 = vmatprep.subr.mxu0 0.0
    %386 = vmatpush1.msra.mxu0 0.0
    %387 = vmatprep.subr.mxu0 0.0
    %388 = vmatpush1.msra.mxu0 0.0
    %389 = vmatprep.subr.mxu0 0.0
    %390 = vmatpush1.msra.mxu0 0.0
    %391 = vmatprep.subr.mxu0 0.0
    %392 = vmatpush1.msra.mxu0 0.0
    %393 = vmatprep.subr.mxu0 0.0
    %394 = vmatpush1.msra.mxu0 0.0
    %395 = vmatprep.subr.mxu0 0.0
    %396 = vmatpush1.msra.mxu0 0.0
    %397 = vmatprep.subr.mxu0 0.0
    %398 = vmatpush1.msra.mxu0 0.0
    %399 = vmatprep.subr.mxu0 0.0
    %400 = vmatpush1.msra.mxu0 0.0
    %401 = vmatprep.subr.mxu0 0.0
    %402 = vmatpush1.msra.mxu0 0.0
    %403 = vmatprep.subr.mxu0 0.0
    %404 = vmatpush1.msra.mxu0 0.0
    %405 = vmatprep.subr.mxu0 0.0
    %406 = vmatpush1.msra.mxu0 0.0
    %407 = vmatprep.subr.mxu0 0.0
    %408 = vmatpush1.msra.mxu0 0.0
    %409 = vmatprep.subr.mxu0 0.0
    %410 = vmatpush1.msra.mxu0 %v133
    %411 = vmatprep.subr.mxu0 0.0
    %412 = vmatpush1.msra.mxu0 %v128
    %413 = vmatprep.subr.mxu0 0.0
    %414 = vmatpush2.msra.mxu0 0.0
    %415 = vmatprep.subr.mxu0 0.0
    %416 = vmatpush2.msra.mxu0 0.0
    %417 = vmatprep.subr.mxu0 0.0
    %418 = vmatpush2.msra.mxu0 0.0
    %419 = vmatprep.subr.mxu0 0.0
    %420 = vmatpush2.msra.mxu0 0.0
    %421 = vmatprep.subr.mxu0 0.0
    %422 = vmatpush2.msra.mxu0 0.0
    %423 = vmatprep.subr.mxu0 0.0
    %424 = vmatpush2.msra.mxu0 0.0
    %425 = vmatprep.subr.mxu0 0.0
    %426 = vmatpush2.msra.mxu0 0.0
    %427 = vmatprep.subr.mxu0 0.0
    %428 = vmatpush2.msra.mxu0 0.0
    %429 = vmatprep.subr.mxu0 0.0
    %430 = vmatpush2.msra.mxu0 0.0
    %431 = vmatprep.subr.mxu0 0.0
    %432 = vmatpush2.msra.mxu0 0.0
    %433 = vmatprep.subr.mxu0 0.0
    %434 = vmatpush2.msra.mxu0 0.0
    %435 = vmatprep.subr.mxu0 0.0
    %436 = vmatpush2.msra.mxu0 0.0
    %437 = vmatprep.subr.mxu0 0.0
    %438 = vmatpush2.msra.mxu0 0.0
    %439 = vmatprep.subr.mxu0 0.0
    %440 = vmatpush2.msra.mxu0 0.0
    %441 = vmatprep.subr.mxu0 0.0
    %442 = vmatpush2.msra.mxu0 0.0
    %443 = vmatprep.subr.mxu0 0.0
    %444 = vmatpush2.msra.mxu0 0.0
    %445 = vmatprep.mubr.f32.mxu0 0.0
    %446 = vmatmul.mubr.f32.gmra.mxu0 %v285
    %v447 = vpop.f32.mrf.mxu0
    %v448 = vadd.f32 0.0, %v447
    %v449 = vpop.f32.mrf.mxu0
    %450 = vmatprep.mubr.f32.mxu0 0.0
    %451 = vmatmul.mubr.f32.gmra.mxu0 %v288
    %v452 = vpop.f32.mrf.mxu0
    %v453 = vadd.f32 0.0, %v452
    %v454 = vpop.f32.mrf.mxu0
    %455 = vdwg.mxu0
    %456 = vmatprep.subr.mxu0 0.0
    %457 = vmatpush1.msra.mxu0 0.0
    %458 = vmatprep.subr.mxu0 0.0
    %459 = vmatpush1.msra.mxu0 0.0
    %460 = vmatprep.subr.mxu0 0.0
    %461 = vmatpush1.msra.mxu0 0.0
    %462 = vmatprep.subr.mxu0 0.0
    %463 = vmatpush1.msra.mxu0 0.0
    %464 = vmatprep.subr.mxu0 0.0
    %465 = vmatpush1.msra.mxu0 0.0
    %466 = vmatprep.subr.mxu0 0.0
    %467 = vmatpush1.msra.mxu0 0.0
    %468 = vmatprep.subr.mxu0 0.0
    %469 = vmatpush1.msra.mxu0 0.0
    %470 = vmatprep.subr.mxu0 0.0
    %471 = vmatpush1.msra.mxu0 0.0
    %472 = vmatprep.subr.mxu0 0.0
    %473 = vmatpush1.msra.mxu0 0.0
    %474 = vmatprep.subr.mxu0 0.0
    %475 = vmatpush1.msra.mxu0 0.0
    %476 = vmatprep.subr.mxu0 0.0
    %477 = vmatpush1.msra.mxu0 0.0
    %478 = vmatprep.subr.mxu0 0.0
    %479 = vmatpush1.msra.mxu0 0.0
    %480 = vmatprep.subr.mxu0 0.0
    %481 = vmatpush1.msra.mxu0 0.0
    %482 = vmatprep.subr.mxu0 0.0
    %483 = vmatpush1.msra.mxu0 0.0
    %484 = vmatprep.subr.mxu0 0.0
    %485 = vmatpush1.msra.mxu0 %v143
    %486 = vmatprep.subr.mxu0 0.0
    %487 = vmatpush1.msra.mxu0 %v138
    %488 = vmatprep.subr.mxu0 0.0
    %489 = vmatpush2.msra.mxu0 0.0
    %490 = vmatprep.subr.mxu0 0.0
    %491 = vmatpush2.msra.mxu0 0.0
    %492 = vmatprep.subr.mxu0 0.0
    %493 = vmatpush2.msra.mxu0 0.0
    %494 = vmatprep.subr.mxu0 0.0
    %495 = vmatpush2.msra.mxu0 0.0
    %496 = vmatprep.subr.mxu0 0.0
    %497 = vmatpush2.msra.mxu0 0.0
    %498 = vmatprep.subr.mxu0 0.0
    %499 = vmatpush2.msra.mxu0 0.0
    %500 = vmatprep.subr.mxu0 0.0
    %501 = vmatpush2.msra.mxu0 0.0
    %502 = vmatprep.subr.mxu0 0.0
    %503 = vmatpush2.msra.mxu0 0.0
    %504 = vmatprep.subr.mxu0 0.0
    %505 = vmatpush2.msra.mxu0 0.0
    %506 = vmatprep.subr.mxu0 0.0
    %507 = vmatpush2.msra.mxu0 0.0
    %508 = vmatprep.subr.mxu0 0.0
    %509 = vmatpush2.msra.mxu0 0.0
    %510 = vmatprep.subr.mxu0 0.0
    %511 = vmatpush2.msra.mxu0 0.0
    %512 = vmatprep.subr.mxu0 0.0
    %513 = vmatpush2.msra.mxu0 0.0
    %514 = vmatprep.subr.mxu0 0.0
    %515 = vmatpush2.msra.mxu0 0.0
    %516 = vmatprep.subr.mxu0 0.0
    %517 = vmatpush2.msra.mxu0 0.0
    %518 = vmatprep.subr.mxu0 0.0
    %519 = vmatpush2.msra.mxu0 0.0
    %520 = vmatprep.mubr.f32.mxu0 0.0
    %521 = vmatmul.mubr.f32.gmra.mxu0 %v291
    %v522 = vpop.f32.mrf.mxu0
    %v523 = vadd.f32 0.0, %v522
    %v524 = vpop.f32.mrf.mxu0
    %525 = vmatprep.mubr.f32.mxu0 0.0
    %526 = vmatmul.mubr.f32.gmra.mxu0 %v294
    %v527 = vpop.f32.mrf.mxu0
    %v528 = vadd.f32 0.0, %v527
    %v529 = vpop.f32.mrf.mxu0
    %530 = vdwg.mxu0
    %v531 = vrcp.pop %v363
    %v532 = vrcp.pop %v368
    %v533 = vrcp.pop %v373
    %v534 = vrcp.pop %v378
    %536 = vset.pattern.permute.xlu0 0
    %537 = vperm.xlu0 %536, %v531
    %v538 = vpop.permute.xlu0 %537
    %541 = vset.pattern.permute.xlu0 0
    %542 = vperm.xlu0 %541, %v532
    %v543 = vpop.permute.xlu0 %542
    %546 = vset.pattern.permute.xlu0 0
    %547 = vperm.xlu0 %546, %v533
    %v548 = vpop.permute.xlu0 %547
    %551 = vset.pattern.permute.xlu0 0
    %552 = vperm.xlu0 %551, %v534
    %v553 = vpop.permute.xlu0 %552
    %v555 = vmul.f32 %v448, %v538
    %v556 = vmul.f32 %v453, %v543
    %v557 = vmul.f32 %v523, %v548
    %v558 = vmul.f32 %v528, %v553
    %v559 = vld [vmem:[%s4] sm:$0xff]
    %v560 = vld [vmem:[%s4 + $0x8] sm:$0xff]
    %v561 = vld [vmem:[%s4 + $0x10] sm:$0xff]
    %v562 = vld [vmem:[%s4 + $0x18] sm:$0xff]
    %v563 = vld [vmem:[%s4 + $0x20] sm:$0xff]
    %v564 = vld [vmem:[%s4 + $0x28] sm:$0xff]
    %v565 = vld [vmem:[%s4 + $0x30] sm:$0xff]
    %v566 = vld [vmem:[%s4 + $0x38] sm:$0xff]
    %v567 = vld [vmem:[%s4 + $0x40] sm:$0xff]
    %v568 = vld [vmem:[%s4 + $0x48] sm:$0xff]
    %v569 = vld [vmem:[%s4 + $0x50] sm:$0xff]
    %v570 = vld [vmem:[%s4 + $0x58] sm:$0xff]
    %v571 = vld [vmem:[%s4 + $0x60] sm:$0x1]
    %v572 = vld [vmem:[%s4 + $0x68] sm:$0x1]
    %v573 = vlaneseq
    %v574 = vshrl.u32 %v573, 7
    %v575 = vsub.s32 0, %v574
    %v576 = vrot.slane %v571, %v575
    %vm577 = vcmask 261120
    %v579 = vsel %vm577, %v555, 0
    %v582 = vsel %vm577, %v556, 0
    %v585 = vsel %vm577, %v557, 0
    %v588 = vsel %vm577, %v558, 0
    %590 = vmatprep.subr.mxu0 0.0
    %591 = vmatpush1.msra.mxu0 0.0
    %592 = vmatprep.subr.mxu0 0.0
    %593 = vmatpush1.msra.mxu0 0.0
    %594 = vmatprep.subr.mxu0 0.0
    %595 = vmatpush1.msra.mxu0 0.0
    %596 = vmatprep.subr.mxu0 0.0
    %597 = vmatpush1.msra.mxu0 0.0
    %598 = vmatprep.subr.mxu0 0.0
    %599 = vmatpush1.msra.mxu0 0.0
    %600 = vmatprep.subr.mxu0 0.0
    %601 = vmatpush1.msra.mxu0 0.0
    %602 = vmatprep.subr.mxu0 0.0
    %603 = vmatpush1.msra.mxu0 0.0
    %604 = vmatprep.subr.mxu0 0.0
    %605 = vmatpush1.msra.mxu0 0.0
    %606 = vmatprep.subr.mxu0 0.0
    %607 = vmatpush1.msra.mxu0 0.0
    %608 = vmatprep.subr.mxu0 0.0
    %609 = vmatpush1.msra.mxu0 0.0
    %610 = vmatprep.subr.mxu0 0.0
    %611 = vmatpush1.msra.mxu0 0.0
    %612 = vmatprep.subr.mxu0 0.0
    %613 = vmatpush1.msra.mxu0 0.0
    %614 = vmatprep.subr.mxu0 0.0
    %615 = vmatpush1.msra.mxu0 %v562
    %616 = vmatprep.subr.mxu0 0.0
    %617 = vmatpush1.msra.mxu0 %v561
    %618 = vmatprep.subr.mxu0 0.0
    %619 = vmatpush1.msra.mxu0 %v560
    %620 = vmatprep.subr.mxu0 0.0
    %621 = vmatpush1.msra.mxu0 %v559
    %622 = vmatprep.subr.mxu0 0.0
    %623 = vmatpush2.msra.mxu0 0.0
    %624 = vmatprep.subr.mxu0 0.0
    %625 = vmatpush2.msra.mxu0 0.0
    %626 = vmatprep.subr.mxu0 0.0
    %627 = vmatpush2.msra.mxu0 0.0
    %628 = vmatprep.subr.mxu0 0.0
    %629 = vmatpush2.msra.mxu0 0.0
    %630 = vmatprep.subr.mxu0 0.0
    %631 = vmatpush2.msra.mxu0 0.0
    %632 = vmatprep.subr.mxu0 0.0
    %633 = vmatpush2.msra.mxu0 0.0
    %634 = vmatprep.subr.mxu0 0.0
    %635 = vmatpush2.msra.mxu0 0.0
    %636 = vmatprep.subr.mxu0 0.0
    %637 = vmatpush2.msra.mxu0 0.0
    %638 = vmatprep.subr.mxu0 0.0
    %639 = vmatpush2.msra.mxu0 0.0
    %640 = vmatprep.subr.mxu0 0.0
    %641 = vmatpush2.msra.mxu0 0.0
    %642 = vmatprep.subr.mxu0 0.0
    %643 = vmatpush2.msra.mxu0 0.0
    %644 = vmatprep.subr.mxu0 0.0
    %645 = vmatpush2.msra.mxu0 0.0
    %646 = vmatprep.subr.mxu0 0.0
    %647 = vmatpush2.msra.mxu0 0.0
    %648 = vmatprep.subr.mxu0 0.0
    %649 = vmatpush2.msra.mxu0 0.0
    %650 = vmatprep.subr.mxu0 0.0
    %651 = vmatpush2.msra.mxu0 0.0
    %652 = vmatprep.subr.mxu0 0.0
    %653 = vmatpush2.msra.mxu0 0.0
    %654 = vmatprep.mubr.f32.mxu0 0.0
    %655 = vmatmul.mubr.f32.gmra.mxu0 %v579
    %v656 = vpop.f32.mrf.mxu0
    %v657 = vadd.f32 %v576, %v656
    %v658 = vpop.f32.mrf.mxu0
    %659 = vmatprep.mubr.f32.mxu0 0.0
    %660 = vmatmul.mubr.f32.gmra.mxu0 %v582
    %v661 = vpop.f32.mrf.mxu0
    %v662 = vadd.f32 %v576, %v661
    %v663 = vpop.f32.mrf.mxu0
    %664 = vmatprep.mubr.f32.mxu0 0.0
    %665 = vmatmul.mubr.f32.gmra.mxu0 %v585
    %v666 = vpop.f32.mrf.mxu0
    %v667 = vadd.f32 %v576, %v666
    %v668 = vpop.f32.mrf.mxu0
    %669 = vmatprep.mubr.f32.mxu0 0.0
    %670 = vmatmul.mubr.f32.gmra.mxu0 %v588
    %v671 = vpop.f32.mrf.mxu0
    %v672 = vadd.f32 %v576, %v671
    %v673 = vpop.f32.mrf.mxu0
    %674 = vdwg.mxu0
    %v675 = vmax.f32 %v657, 0.0
    %v676 = vmax.f32 %v662, 0.0
    %v677 = vmax.f32 %v667, 0.0
    %v678 = vmax.f32 %v672, 0.0
    %v679 = vlaneseq
    %v680 = vshrl.u32 %v679, 7
    %v681 = vsub.s32 0, %v680
    %v682 = vrot.slane %v572, %v681
    %v684 = vsel %vm577, %v675, 0
    %v687 = vsel %vm577, %v676, 0
    %v690 = vsel %vm577, %v677, 0
    %v693 = vsel %vm577, %v678, 0
    %695 = vmatprep.subr.mxu0 0.0
    %696 = vmatpush1.msra.mxu0 0.0
    %697 = vmatprep.subr.mxu0 0.0
    %698 = vmatpush1.msra.mxu0 0.0
    %699 = vmatprep.subr.mxu0 0.0
    %700 = vmatpush1.msra.mxu0 0.0
    %701 = vmatprep.subr.mxu0 0.0
    %702 = vmatpush1.msra.mxu0 0.0
    %703 = vmatprep.subr.mxu0 0.0
    %704 = vmatpush1.msra.mxu0 0.0
    %705 = vmatprep.subr.mxu0 0.0
    %706 = vmatpush1.msra.mxu0 0.0
    %707 = vmatprep.subr.mxu0 0.0
    %708 = vmatpush1.msra.mxu0 0.0
    %709 = vmatprep.subr.mxu0 0.0
    %710 = vmatpush1.msra.mxu0 0.0
    %711 = vmatprep.subr.mxu0 0.0
    %712 = vmatpush1.msra.mxu0 0.0
    %713 = vmatprep.subr.mxu0 0.0
    %714 = vmatpush1.msra.mxu0 0.0
    %715 = vmatprep.subr.mxu0 0.0
    %716 = vmatpush1.msra.mxu0 0.0
    %717 = vmatprep.subr.mxu0 0.0
    %718 = vmatpush1.msra.mxu0 0.0
    %719 = vmatprep.subr.mxu0 0.0
    %720 = vmatpush1.msra.mxu0 %v566
    %721 = vmatprep.subr.mxu0 0.0
    %722 = vmatpush1.msra.mxu0 %v565
    %723 = vmatprep.subr.mxu0 0.0
    %724 = vmatpush1.msra.mxu0 %v564
    %725 = vmatprep.subr.mxu0 0.0
    %726 = vmatpush1.msra.mxu0 %v563
    %727 = vmatprep.subr.mxu0 0.0
    %728 = vmatpush2.msra.mxu0 0.0
    %729 = vmatprep.subr.mxu0 0.0
    %730 = vmatpush2.msra.mxu0 0.0
    %731 = vmatprep.subr.mxu0 0.0
    %732 = vmatpush2.msra.mxu0 0.0
    %733 = vmatprep.subr.mxu0 0.0
    %734 = vmatpush2.msra.mxu0 0.0
    %735 = vmatprep.subr.mxu0 0.0
    %736 = vmatpush2.msra.mxu0 0.0
    %737 = vmatprep.subr.mxu0 0.0
    %738 = vmatpush2.msra.mxu0 0.0
    %739 = vmatprep.subr.mxu0 0.0
    %740 = vmatpush2.msra.mxu0 0.0
    %741 = vmatprep.subr.mxu0 0.0
    %742 = vmatpush2.msra.mxu0 0.0
    %743 = vmatprep.subr.mxu0 0.0
    %744 = vmatpush2.msra.mxu0 0.0
    %745 = vmatprep.subr.mxu0 0.0
    %746 = vmatpush2.msra.mxu0 0.0
    %747 = vmatprep.subr.mxu0 0.0
    %748 = vmatpush2.msra.mxu0 0.0
    %749 = vmatprep.subr.mxu0 0.0
    %750 = vmatpush2.msra.mxu0 0.0
    %751 = vmatprep.subr.mxu0 0.0
    %752 = vmatpush2.msra.mxu0 0.0
    %753 = vmatprep.subr.mxu0 0.0
    %754 = vmatpush2.msra.mxu0 0.0
    %755 = vmatprep.subr.mxu0 0.0
    %756 = vmatpush2.msra.mxu0 0.0
    %757 = vmatprep.subr.mxu0 0.0
    %758 = vmatpush2.msra.mxu0 0.0
    %759 = vmatprep.mubr.f32.mxu0 0.0
    %760 = vmatmul.mubr.f32.gmra.mxu0 %v684
    %v761 = vpop.f32.mrf.mxu0
    %v762 = vadd.f32 %v682, %v761
    %v763 = vpop.f32.mrf.mxu0
    %764 = vmatprep.mubr.f32.mxu0 0.0
    %765 = vmatmul.mubr.f32.gmra.mxu0 %v687
    %v766 = vpop.f32.mrf.mxu0
    %v767 = vadd.f32 %v682, %v766
    %v768 = vpop.f32.mrf.mxu0
    %769 = vmatprep.mubr.f32.mxu0 0.0
    %770 = vmatmul.mubr.f32.gmra.mxu0 %v690
    %v771 = vpop.f32.mrf.mxu0
    %v772 = vadd.f32 %v682, %v771
    %v773 = vpop.f32.mrf.mxu0
    %774 = vmatprep.mubr.f32.mxu0 0.0
    %775 = vmatmul.mubr.f32.gmra.mxu0 %v693
    %v776 = vpop.f32.mrf.mxu0
    %v777 = vadd.f32 %v682, %v776
    %v778 = vpop.f32.mrf.mxu0
    %779 = vdwg.mxu0
    %v780 = vadd.f32 %v762, %v555
    %v781 = vadd.f32 %v767, %v556
    %v782 = vadd.f32 %v772, %v557
    %v783 = vadd.f32 %v777, %v558
    %v784 = vmax.f32 %v780, 0.0
    %v785 = vmax.f32 %v781, 0.0
    %v786 = vmax.f32 %v782, 0.0
    %v787 = vmax.f32 %v783, 0.0
    %788 = vst.msk [vmem:[#allocation3] sm:$0xff] %vm577, %v784
    %789 = vst.msk [vmem:[#allocation3 + $0x8] sm:$0xff] %vm577, %v785
    %v790 = vld [vmem:[%s5] sm:$0xff]
    %v791 = vld [vmem:[%s5 + $0x8] sm:$0xff]
    %v792 = vld [vmem:[%s5 + $0x10] sm:$0xff]
    %v793 = vld [vmem:[%s5 + $0x18] sm:$0xff]
    %v795 = vsel %vm577, %v784, 0
    %v798 = vsel %vm577, %v785, 0
    %800 = vmatprep.subr.mxu0 0.0
    %801 = vmatpush1.msra.mxu0 0.0
    %802 = vmatprep.subr.mxu0 0.0
    %803 = vmatpush1.msra.mxu0 0.0
    %804 = vmatprep.subr.mxu0 0.0
    %805 = vmatpush1.msra.mxu0 0.0
    %806 = vmatprep.subr.mxu0 0.0
    %807 = vmatpush1.msra.mxu0 0.0
    %808 = vmatprep.subr.mxu0 0.0
    %809 = vmatpush1.msra.mxu0 0.0
    %810 = vmatprep.subr.mxu0 0.0
    %811 = vmatpush1.msra.mxu0 0.0
    %812 = vmatprep.subr.mxu0 0.0
    %813 = vmatpush1.msra.mxu0 0.0
    %814 = vmatprep.subr.mxu0 0.0
    %815 = vmatpush1.msra.mxu0 0.0
    %816 = vmatprep.subr.mxu0 0.0
    %817 = vmatpush1.msra.mxu0 0.0
    %818 = vmatprep.subr.mxu0 0.0
    %819 = vmatpush1.msra.mxu0 0.0
    %820 = vmatprep.subr.mxu0 0.0
    %821 = vmatpush1.msra.mxu0 0.0
    %822 = vmatprep.subr.mxu0 0.0
    %823 = vmatpush1.msra.mxu0 0.0
    %824 = vmatprep.subr.mxu0 0.0
    %825 = vmatpush1.msra.mxu0 %v793
    %826 = vmatprep.subr.mxu0 0.0
    %827 = vmatpush1.msra.mxu0 %v792
    %828 = vmatprep.subr.mxu0 0.0
    %829 = vmatpush1.msra.mxu0 %v791
    %830 = vmatprep.subr.mxu0 0.0
    %831 = vmatpush1.msra.mxu0 %v790
    %832 = vmatprep.subr.mxu0 0.0
    %833 = vmatpush2.msra.mxu0 0.0
    %834 = vmatprep.subr.mxu0 0.0
    %835 = vmatpush2.msra.mxu0 0.0
    %836 = vmatprep.subr.mxu0 0.0
    %837 = vmatpush2.msra.mxu0 0.0
    %838 = vmatprep.subr.mxu0 0.0
    %839 = vmatpush2.msra.mxu0 0.0
    %840 = vmatprep.subr.mxu0 0.0
    %841 = vmatpush2.msra.mxu0 0.0
    %842 = vmatprep.subr.mxu0 0.0
    %843 = vmatpush2.msra.mxu0 0.0
    %844 = vmatprep.subr.mxu0 0.0
    %845 = vmatpush2.msra.mxu0 0.0
    %846 = vmatprep.subr.mxu0 0.0
    %847 = vmatpush2.msra.mxu0 0.0
    %848 = vmatprep.subr.mxu0 0.0
    %849 = vmatpush2.msra.mxu0 0.0
    %850 = vmatprep.subr.mxu0 0.0
    %851 = vmatpush2.msra.mxu0 0.0
    %852 = vmatprep.subr.mxu0 0.0
    %853 = vmatpush2.msra.mxu0 0.0
    %854 = vmatprep.subr.mxu0 0.0
    %855 = vmatpush2.msra.mxu0 0.0
    %856 = vmatprep.subr.mxu0 0.0
    %857 = vmatpush2.msra.mxu0 0.0
    %858 = vmatprep.subr.mxu0 0.0
    %859 = vmatpush2.msra.mxu0 0.0
    %860 = vmatprep.subr.mxu0 0.0
    %861 = vmatpush2.msra.mxu0 0.0
    %862 = vmatprep.subr.mxu0 0.0
    %863 = vmatpush2.msra.mxu0 0.0
    %864 = vmatprep.mubr.f32.mxu0 0.0
    %865 = vmatmul.mubr.f32.gmra.mxu0 %v795
    %v866 = vpop.f32.mrf.mxu0
    %v867 = vadd.f32 0.0, %v866
    %v868 = vpop.f32.mrf.mxu0
    %869 = vmatprep.mubr.f32.mxu0 0.0
    %870 = vmatmul.mubr.f32.gmra.mxu0 %v798
    %v871 = vpop.f32.mrf.mxu0
    %v872 = vadd.f32 0.0, %v871
    %v873 = vpop.f32.mrf.mxu0
    %874 = vdwg.mxu0
    %v876 = vsel %vm259, %v36, 0
    %v879 = vsel %vm259, %v37, 0
    %881 = vmatprep.subr.mxu0 0.0
    %882 = vmatpush1.msra.mxu0 0.0
    %883 = vmatprep.subr.mxu0 0.0
    %884 = vmatpush1.msra.mxu0 0.0
    %885 = vmatprep.subr.mxu0 0.0
    %886 = vmatpush1.msra.mxu0 0.0
    %887 = vmatprep.subr.mxu0 0.0
    %888 = vmatpush1.msra.mxu0 0.0
    %889 = vmatprep.subr.mxu0 0.0
    %890 = vmatpush1.msra.mxu0 0.0
    %891 = vmatprep.subr.mxu0 0.0
    %892 = vmatpush1.msra.mxu0 0.0
    %893 = vmatprep.subr.mxu0 0.0
    %894 = vmatpush1.msra.mxu0 0.0
    %895 = vmatprep.subr.mxu0 0.0
    %896 = vmatpush1.msra.mxu0 0.0
    %897 = vmatprep.subr.mxu0 0.0
    %898 = vmatpush1.msra.mxu0 0.0
    %899 = vmatprep.subr.mxu0 0.0
    %900 = vmatpush1.msra.mxu0 0.0
    %901 = vmatprep.subr.mxu0 0.0
    %902 = vmatpush1.msra.mxu0 0.0
    %903 = vmatprep.subr.mxu0 0.0
    %904 = vmatpush1.msra.mxu0 0.0
    %905 = vmatprep.subr.mxu0 0.0
    %906 = vmatpush1.msra.mxu0 0.0
    %907 = vmatprep.subr.mxu0 0.0
    %908 = vmatpush1.msra.mxu0 0.0
    %909 = vmatprep.subr.mxu0 0.0
    %910 = vmatpush1.msra.mxu0 %v872
    %911 = vmatprep.subr.mxu0 0.0
    %912 = vmatpush1.msra.mxu0 %v867
    %913 = vmatprep.subr.mxu0 0.0
    %914 = vmatpush2.msra.mxu0 0.0
    %915 = vmatprep.subr.mxu0 0.0
    %916 = vmatpush2.msra.mxu0 0.0
    %917 = vmatprep.subr.mxu0 0.0
    %918 = vmatpush2.msra.mxu0 0.0
    %919 = vmatprep.subr.mxu0 0.0
    %920 = vmatpush2.msra.mxu0 0.0
    %921 = vmatprep.subr.mxu0 0.0
    %922 = vmatpush2.msra.mxu0 0.0
    %923 = vmatprep.subr.mxu0 0.0
    %924 = vmatpush2.msra.mxu0 0.0
    %925 = vmatprep.subr.mxu0 0.0
    %926 = vmatpush2.msra.mxu0 0.0
    %927 = vmatprep.subr.mxu0 0.0
    %928 = vmatpush2.msra.mxu0 0.0
    %929 = vmatprep.subr.mxu0 0.0
    %930 = vmatpush2.msra.mxu0 0.0
    %931 = vmatprep.subr.mxu0 0.0
    %932 = vmatpush2.msra.mxu0 0.0
    %933 = vmatprep.subr.mxu0 0.0
    %934 = vmatpush2.msra.mxu0 0.0
    %935 = vmatprep.subr.mxu0 0.0
    %936 = vmatpush2.msra.mxu0 0.0
    %937 = vmatprep.subr.mxu0 0.0
    %938 = vmatpush2.msra.mxu0 0.0
    %939 = vmatprep.subr.mxu0 0.0
    %940 = vmatpush2.msra.mxu0 0.0
    %941 = vmatprep.subr.mxu0 0.0
    %942 = vmatpush2.msra.mxu0 0.0
    %943 = vmatprep.subr.mxu0 0.0
    %944 = vmatpush2.msra.mxu0 0.0
    %945 = vmatprep.mubr.f32.mxu0 0.0
    %946 = vmatmul.mubr.f32.gmra.mxu0 %v876
    %v947 = vpop.f32.mrf.mxu0
    %v948 = vadd.f32 0.0, %v947
    %v949 = vpop.f32.mrf.mxu0
    %950 = vmatprep.mubr.f32.mxu0 0.0
    %951 = vmatmul.mubr.f32.gmra.mxu0 %v879
    %v952 = vpop.f32.mrf.mxu0
    %v953 = vadd.f32 0.0, %v952
    %v954 = vpop.f32.mrf.mxu0
    %955 = vdwg.mxu0
    %956 = vst.msk [vmem:[#allocation5] sm:$0xff] %vm48, %v948
    %957 = vst.msk [vmem:[#allocation5 + $0x8] sm:$0xff] %vm48, %v953
    %960 = vrot.lane.b32.xlu0 %v786, 32
    %v961 = vpop.permute.xlu0 %960
    %962 = vrot.lane.b32.xlu0 %v787, 32
    %v963 = vpop.permute.xlu0 %962
    %v966 = vsel %vm577, %v784, %v961
    %v967 = vsel %vm577, %v785, %v963
    %v968 = vsel %vm48, %v966, 1.0
    %v969 = vsel %vm48, %v967, 1.0
    %v970 = vld [vmem:[%s2] sm:$0xff]
    %v971 = vld [vmem:[%s2 + $0x8] sm:$0xff]
    %v973 = vsel %vm259, %v970, 0
    %v976 = vsel %vm259, %v971, 0
    %978 = vmatprep.subr.mxu0 0.0
    %979 = vmatpush1.msra.mxu0 0.0
    %980 = vmatprep.subr.mxu0 0.0
    %981 = vmatpush1.msra.mxu0 0.0
    %982 = vmatprep.subr.mxu0 0.0
    %983 = vmatpush1.msra.mxu0 0.0
    %984 = vmatprep.subr.mxu0 0.0
    %985 = vmatpush1.msra.mxu0 0.0
    %986 = vmatprep.subr.mxu0 0.0
    %987 = vmatpush1.msra.mxu0 0.0
    %988 = vmatprep.subr.mxu0 0.0
    %989 = vmatpush1.msra.mxu0 0.0
    %990 = vmatprep.subr.mxu0 0.0
    %991 = vmatpush1.msra.mxu0 0.0
    %992 = vmatprep.subr.mxu0 0.0
    %993 = vmatpush1.msra.mxu0 0.0
    %994 = vmatprep.subr.mxu0 0.0
    %995 = vmatpush1.msra.mxu0 0.0
    %996 = vmatprep.subr.mxu0 0.0
    %997 = vmatpush1.msra.mxu0 0.0
    %998 = vmatprep.subr.mxu0 0.0
    %999 = vmatpush1.msra.mxu0 0.0
    %1000 = vmatprep.subr.mxu0 0.0
    %1001 = vmatpush1.msra.mxu0 0.0
    %1002 = vmatprep.subr.mxu0 0.0
    %1003 = vmatpush1.msra.mxu0 0.0
    %1004 = vmatprep.subr.mxu0 0.0
    %1005 = vmatpush1.msra.mxu0 0.0
    %1006 = vmatprep.subr.mxu0 0.0
    %1007 = vmatpush1.msra.mxu0 %v969
    %1008 = vmatprep.subr.mxu0 0.0
    %1009 = vmatpush1.msra.mxu0 %v968
    %1010 = vmatprep.subr.mxu0 0.0
    %1011 = vmatpush2.msra.mxu0 0.0
    %1012 = vmatprep.subr.mxu0 0.0
    %1013 = vmatpush2.msra.mxu0 0.0
    %1014 = vmatprep.subr.mxu0 0.0
    %1015 = vmatpush2.msra.mxu0 0.0
    %1016 = vmatprep.subr.mxu0 0.0
    %1017 = vmatpush2.msra.mxu0 0.0
    %1018 = vmatprep.subr.mxu0 0.0
    %1019 = vmatpush2.msra.mxu0 0.0
    %1020 = vmatprep.subr.mxu0 0.0
    %1021 = vmatpush2.msra.mxu0 0.0
    %1022 = vmatprep.subr.mxu0 0.0
    %1023 = vmatpush2.msra.mxu0 0.0
    %1024 = vmatprep.subr.mxu0 0.0
    %1025 = vmatpush2.msra.mxu0 0.0
    %1026 = vmatprep.subr.mxu0 0.0
    %1027 = vmatpush2.msra.mxu0 0.0
    %1028 = vmatprep.subr.mxu0 0.0
    %1029 = vmatpush2.msra.mxu0 0.0
    %1030 = vmatprep.subr.mxu0 0.0
    %1031 = vmatpush2.msra.mxu0 0.0
    %1032 = vmatprep.subr.mxu0 0.0
    %1033 = vmatpush2.msra.mxu0 0.0
    %1034 = vmatprep.subr.mxu0 0.0
    %1035 = vmatpush2.msra.mxu0 0.0
    %1036 = vmatprep.subr.mxu0 0.0
    %1037 = vmatpush2.msra.mxu0 0.0
    %1038 = vmatprep.subr.mxu0 0.0
    %1039 = vmatpush2.msra.mxu0 0.0
    %1040 = vmatprep.subr.mxu0 0.0
    %1041 = vmatpush2.msra.mxu0 0.0
    %1042 = vmatprep.mubr.f32.mxu0 0.0
    %1043 = vmatmul.mubr.f32.gmra.mxu0 %v973
    %v1044 = vpop.f32.mrf.mxu0
    %v1045 = vadd.f32 0.0, %v1044
    %v1046 = vpop.f32.mrf.mxu0
    %1047 = vmatprep.mubr.f32.mxu0 0.0
    %1048 = vmatmul.mubr.f32.gmra.mxu0 %v976
    %v1049 = vpop.f32.mrf.mxu0
    %v1050 = vadd.f32 0.0, %v1049
    %v1051 = vpop.f32.mrf.mxu0
    %1052 = vdwg.mxu0
    %v1053 = vmax.f32 %v1045, 1e-12
    %v1054 = vmax.f32 %v1050, 1e-12
    %v1055 = vrcp.pop %v1053
    %v1056 = vrcp.pop %v1054
    %1058 = vset.pattern.permute.xlu0 64
    %1059 = vperm.xlu0 %1058, %v1055
    %v1060 = vpop.permute.xlu0 %1059
    %1063 = vset.pattern.permute.xlu0 64
    %1064 = vperm.xlu0 %1063, %v1056
    %v1065 = vpop.permute.xlu0 %1064
    %v1067 = vmul.f32 %v1045, %v1060
    %v1068 = vmul.f32 %v1050, %v1065
    %v1069 = vmul.f32 %v1067, %v1067
    %v1070 = vmul.f32 %v1068, %v1068
    %v1071 = vsel %vm577, %v1069, 0.0
    %1072 = vadd.xlane.f32.xlu0 %v1071
    %v1073 = vpop.xlane.xlu0 %1072
    %v1074 = vsel %vm577, %v1070, 0.0
    %1075 = vadd.xlane.f32.xlu0 %v1074
    %v1076 = vpop.xlane.xlu0 %1075
    %v1077 = vmax.f32 %v1073, 1e-24
    %v1078 = vmax.f32 %v1076, 1e-24
    %v1079 = vrsqrt.pop %v1077
    %v1080 = vrsqrt.pop %v1078
    %v1081 = vmul.f32 %v1067, %v1079
    %v1082 = vmul.f32 %v1068, %v1080
    %v1083 = vxor.u32 %v1081, 2147483648
    %v1084 = vxor.u32 %v1082, 2147483648
    %v1085 = vmul.f32 %v1083, 1.442695
    %v1086 = vpow.pop %v1085
    %v1087 = vmul.f32 %v1084, 1.442695
    %v1088 = vpow.pop %v1087
    %v1089 = vadd.f32 %v1086, 1.0
    %v1090 = vadd.f32 %v1088, 1.0
    %v1091 = vrcp.pop %v1089
    %v1092 = vmul.f32 1.0, %v1091
    %v1093 = vrcp.pop %v1090
    %v1094 = vmul.f32 1.0, %v1093
    %1097 = vrot.lane.b32.xlu0 %v1069, 96
    %v1098 = vpop.permute.xlu0 %1097
    %1099 = vrot.lane.b32.xlu0 %v1070, 96
    %v1100 = vpop.permute.xlu0 %1099
    %v1103 = vsel %vm577, %v1098, 0.0
    %1104 = vadd.xlane.f32.xlu0 %v1103
    %v1105 = vpop.xlane.xlu0 %1104
    %v1106 = vsel %vm577, %v1100, 0.0
    %1107 = vadd.xlane.f32.xlu0 %v1106
    %v1108 = vpop.xlane.xlu0 %1107
    %v1109 = vmax.f32 %v1105, 1e-24
    %v1110 = vmax.f32 %v1108, 1e-24
    %v1111 = vrsqrt.pop %v1109
    %v1112 = vrsqrt.pop %v1110
    %v1113 = vmul.f32 %v1067, %v1111
    %v1114 = vmul.f32 %v1068, %v1112
    %v1115 = vxor.u32 %v1113, 2147483648
    %v1116 = vxor.u32 %v1114, 2147483648
    %v1117 = vmul.f32 %v1115, 1.442695
    %v1118 = vpow.pop %v1117
    %v1119 = vmul.f32 %v1116, 1.442695
    %v1120 = vpow.pop %v1119
    %v1121 = vadd.f32 %v1118, 1.0
    %v1122 = vadd.f32 %v1120, 1.0
    %v1123 = vrcp.pop %v1121
    %v1124 = vmul.f32 1.0, %v1123
    %v1125 = vrcp.pop %v1122
    %v1126 = vmul.f32 1.0, %v1125
    %1129 = vrot.lane.b32.xlu0 %v1124, 96
    %v1130 = vpop.permute.xlu0 %1129
    %1131 = vrot.lane.b32.xlu0 %v1126, 96
    %v1132 = vpop.permute.xlu0 %1131
    %v1134 = vsel %vm577, %v1092, 0
    %v1137 = vsel %vm577, %v1094, 0
    %v1139 = vsel %vm577, %v1130, 0
    %v1141 = vsel %vm577, %v1132, 0
    %1143 = vmatprep.subr.mxu0 0.0
    %1144 = vmatpush1.msra.mxu0 0.0
    %1145 = vmatprep.subr.mxu0 0.0
    %1146 = vmatpush1.msra.mxu0 0.0
    %1147 = vmatprep.subr.mxu0 0.0
    %1148 = vmatpush1.msra.mxu0 0.0
    %1149 = vmatprep.subr.mxu0 0.0
    %1150 = vmatpush1.msra.mxu0 0.0
    %1151 = vmatprep.subr.mxu0 0.0
    %1152 = vmatpush1.msra.mxu0 0.0
    %1153 = vmatprep.subr.mxu0 0.0
    %1154 = vmatpush1.msra.mxu0 0.0
    %1155 = vmatprep.subr.mxu0 0.0
    %1156 = vmatpush1.msra.mxu0 0.0
    %1157 = vmatprep.subr.mxu0 0.0
    %1158 = vmatpush1.msra.mxu0 0.0
    %1159 = vmatprep.subr.mxu0 0.0
    %1160 = vmatpush1.msra.mxu0 0.0
    %1161 = vmatprep.subr.mxu0 0.0
    %1162 = vmatpush1.msra.mxu0 0.0
    %1163 = vmatprep.subr.mxu0 0.0
    %1164 = vmatpush1.msra.mxu0 0.0
    %1165 = vmatprep.subr.mxu0 0.0
    %1166 = vmatpush1.msra.mxu0 0.0
    %1167 = vmatprep.subr.mxu0 0.0
    %1168 = vmatpush1.msra.mxu0 %v570
    %1169 = vmatprep.subr.mxu0 0.0
    %1170 = vmatpush1.msra.mxu0 %v569
    %1171 = vmatprep.subr.mxu0 0.0
    %1172 = vmatpush1.msra.mxu0 %v568
    %1173 = vmatprep.subr.mxu0 0.0
    %1174 = vmatpush1.msra.mxu0 %v567
    %1175 = vmatprep.subr.mxu0 0.0
    %1176 = vmatpush2.msra.mxu0 0.0
    %1177 = vmatprep.subr.mxu0 0.0
    %1178 = vmatpush2.msra.mxu0 0.0
    %1179 = vmatprep.subr.mxu0 0.0
    %1180 = vmatpush2.msra.mxu0 0.0
    %1181 = vmatprep.subr.mxu0 0.0
    %1182 = vmatpush2.msra.mxu0 0.0
    %1183 = vmatprep.subr.mxu0 0.0
    %1184 = vmatpush2.msra.mxu0 0.0
    %1185 = vmatprep.subr.mxu0 0.0
    %1186 = vmatpush2.msra.mxu0 0.0
    %1187 = vmatprep.subr.mxu0 0.0
    %1188 = vmatpush2.msra.mxu0 0.0
    %1189 = vmatprep.subr.mxu0 0.0
    %1190 = vmatpush2.msra.mxu0 0.0
    %1191 = vmatprep.subr.mxu0 0.0
    %1192 = vmatpush2.msra.mxu0 0.0
    %1193 = vmatprep.subr.mxu0 0.0
    %1194 = vmatpush2.msra.mxu0 0.0
    %1195 = vmatprep.subr.mxu0 0.0
    %1196 = vmatpush2.msra.mxu0 0.0
    %1197 = vmatprep.subr.mxu0 0.0
    %1198 = vmatpush2.msra.mxu0 0.0
    %1199 = vmatprep.subr.mxu0 0.0
    %1200 = vmatpush2.msra.mxu0 0.0
    %1201 = vmatprep.subr.mxu0 0.0
    %1202 = vmatpush2.msra.mxu0 0.0
    %1203 = vmatprep.subr.mxu0 0.0
    %1204 = vmatpush2.msra.mxu0 0.0
    %1205 = vmatprep.subr.mxu0 0.0
    %1206 = vmatpush2.msra.mxu0 0.0
    %1207 = vmatprep.mubr.f32.mxu0 0.0
    %1208 = vmatmul.mubr.f32.gmra.mxu0 %v1134
    %v1209 = vpop.f32.mrf.mxu0
    %v1210 = vadd.f32 0.0, %v1209
    %v1211 = vpop.f32.mrf.mxu0
    %1212 = vmatprep.mubr.f32.mxu0 0.0
    %1213 = vmatmul.mubr.f32.gmra.mxu0 %v1137
    %v1214 = vpop.f32.mrf.mxu0
    %v1215 = vadd.f32 0.0, %v1214
    %v1216 = vpop.f32.mrf.mxu0
    %1217 = vmatprep.mubr.f32.mxu0 0.0
    %1218 = vmatmul.mubr.f32.gmra.mxu0 %v1139
    %v1219 = vpop.f32.mrf.mxu0
    %v1220 = vadd.f32 0.0, %v1219
    %v1221 = vpop.f32.mrf.mxu0
    %1222 = vmatprep.mubr.f32.mxu0 0.0
    %1223 = vmatmul.mubr.f32.gmra.mxu0 %v1141
    %v1224 = vpop.f32.mrf.mxu0
    %v1225 = vadd.f32 0.0, %v1224
    %v1226 = vpop.f32.mrf.mxu0
    %1227 = vdwg.mxu0
    %v1228 = vmul.f32 %v784, %v1210
    %v1229 = vmul.f32 %v785, %v1215
    %v1230 = vmul.f32 %v786, %v1220
    %v1231 = vmul.f32 %v787, %v1225
    %v1232 = vsel %vm577, %v1228, 0.0
    %1233 = vadd.xlane.f32.xlu0 %v1232
    %v1234 = vpop.xlane.xlu0 %1233
    %v1235 = vsel %vm577, %v1229, 0.0
    %1236 = vadd.xlane.f32.xlu0 %v1235
    %v1237 = vpop.xlane.xlu0 %1236
    %v1238 = vsel %vm577, %v1230, 0.0
    %1239 = vadd.xlane.f32.xlu0 %v1238
    %v1240 = vpop.xlane.xlu0 %1239
    %v1241 = vsel %vm577, %v1231, 0.0
    %1242 = vadd.xlane.f32.xlu0 %v1241
    %v1243 = vpop.xlane.xlu0 %1242
    %v1244 = vmul.f32 %v784, %v1220
    %v1245 = vmul.f32 %v785, %v1225
    %v1246 = vmul.f32 %v786, %v1210
    %v1247 = vmul.f32 %v787, %v1215
    %v1248 = vsel %vm577, %v1244, 0.0
    %1249 = vadd.xlane.f32.xlu0 %v1248
    %v1250 = vpop.xlane.xlu0 %1249
    %v1251 = vsel %vm577, %v1245, 0.0
    %1252 = vadd.xlane.f32.xlu0 %v1251
    %v1253 = vpop.xlane.xlu0 %1252
    %v1254 = vsel %vm577, %v1246, 0.0
    %1255 = vadd.xlane.f32.xlu0 %v1254
    %v1256 = vpop.xlane.xlu0 %1255
    %v1257 = vsel %vm577, %v1247, 0.0
    %1258 = vadd.xlane.f32.xlu0 %v1257
    %v1259 = vpop.xlane.xlu0 %1258
    %s1260 = sld [smem:[#allocation2]]
    %vm1261 = vcmask 7168
    %v1262 = vsel %vm1261, %v1234, %v1256
    %v1263 = vsel %vm1261, %v1237, %v1259
    %vm1264 = vcmask 15360
    %v1265 = vsel %vm1264, %v1262, %v1240
    %v1266 = vsel %vm1264, %v1263, %v1243
    %vm1267 = vcmask 23552
    %v1268 = vsel %vm1267, %v1265, %v1250
    %v1269 = vsel %vm1267, %v1266, %v1253
    %v1270 = vstv %s1260
    %v1271 = vadd.f32 %v1268, %v1270
    %v1272 = vadd.f32 %v1269, %v1270
    %vm1273 = vcmask 31744
    %1274 = vst.msk [vmem:[%s9] sm:$0xff] %vm1273, %v1271
    %1275 = vst.msk [vmem:[%s9 + $0x8] sm:$0xff] %vm1273, %v1272
    // Predicated region
    $region30: #{tpu_custom_call.1} parent=1 // pred_check
      _
    $region31: #{tpu_custom_call.1} parent=1 // pred_check_branch
      %1277 = sbr.rel (0) target = $region33
    $region32: #{tpu_custom_call.1} parent=1 // pred_region
      %s1279 = ssub.s32 256, 256
      %1280 = vsyncadd [#allocation4], %s1279
      %s1281 = sshll.u32 [#allocation3], 4
      %s1282 = int_to_ptr.vmem [resolvable:$true] %s1281
      %1287 = dma.vmem_to_hbm [thread:$0]  %s1282, 256, %s7, [#allocation4], 128, 128, 8
    $region33: #{tpu_custom_call.1} parent=1 // pred_fallthru
      _
    // Predicated region
    $region34: #{tpu_custom_call.1} parent=1 // pred_check
      _
    $region35: #{tpu_custom_call.1} parent=1 // pred_check_branch
      %1289 = sbr.rel (0) target = $region37
    $region36: #{tpu_custom_call.1} parent=1 // pred_region
      %s1291 = ssub.s32 256, 256
      %1292 = vsyncadd [#allocation6], %s1291
      %s1293 = sshll.u32 [#allocation5], 4
      %s1294 = int_to_ptr.vmem [resolvable:$true] %s1293
      %1299 = dma.vmem_to_hbm [thread:$0]  %s1294, 256, %s8, [#allocation6], 128, 128, 8
    $region37: #{tpu_custom_call.1} parent=1 // pred_fallthru
      _
    // Predicated region
    $region38: #{tpu_custom_call.1} parent=1 // pred_check
      _
    $region39: #{tpu_custom_call.1} parent=1 // pred_check_branch
      %1301 = sbr.rel (0) target = $region41
    $region40: #{tpu_custom_call.1} parent=1 // pred_region
      _
    $region41: #{tpu_custom_call.1} parent=1 // pred_fallthru
      _
    // Predicated region
    $region42: #{tpu_custom_call.1} parent=1 // pred_check
      _
    $region43: #{tpu_custom_call.1} parent=1 // pred_check_branch
      %1303 = sbr.rel (0) target = $region45
    $region44: #{tpu_custom_call.1} parent=1 // pred_region
      %1304 = dma.done [#allocation4], 256
    $region45: #{tpu_custom_call.1} parent=1 // pred_fallthru
      _
    // Predicated region
    $region46: #{tpu_custom_call.1} parent=1 // pred_check
      _
    $region47: #{tpu_custom_call.1} parent=1 // pred_check_branch
      %1306 = sbr.rel (0) target = $region49
    $region48: #{tpu_custom_call.1} parent=1 // pred_region
      %1307 = dma.done [#allocation6], 256
    $region49: #{tpu_custom_call.1} parent=1 // pred_fallthru
      _
    // Predicated region
    $region50: #{tpu_custom_call.1} parent=1 // pred_check
      _
    $region51: #{tpu_custom_call.1} parent=1 // pred_check_branch
      %1309 = sbr.rel (0) target = $region53
    $region52: #{tpu_custom_call.1} parent=1 // pred_region
      _
    $region53: #{tpu_custom_call.1} parent=1 // pred_fallthru
      _
    %1310 = vsyncpa [#allocation4], 1
    %1311 = vsyncpa [#allocation6], 1

</llo_original>
